<compile_context>
chip_gen: v5e
topology: v5e:2x2
jax: 0.10.0
libtpu: 0.0.40
codegen_flags: <defaults>
</compile_context>

<pallas_src>
import functools

import jax
import jax.numpy as jnp
from jax.experimental import pallas as pl
from jax.experimental.pallas import tpu as pltpu


def _round_up(n, m):
    return ((n + m - 1) // m) * m


def _leaky(v):
    # nn.LeakyReLU() default negative_slope = 0.01
    return jnp.maximum(v, 0.01 * v)


def _mlp_math(x, w1, b1, stages, w2, b2, w3_row, b3, *, compute_dtype):
    """Full Temporal_Critic MLP on plain arrays.

    Used both inside the Pallas kernel (on loaded tiles) and as the
    dtype-matched pure-JAX reference.  All matmuls take `compute_dtype`
    (bf16 by default) inputs and accumulate in f32.
    """

    def dot(a, w):
        return jnp.dot(a.astype(compute_dtype), w,
                       preferred_element_type=jnp.float32)

    # y1 = leaky_relu(w1(x_in))
    y = _leaky(dot(x, w1) + b1)
    # three residual "Linear" stages
    for wa, ba, wb, bb in stages:
        t = _leaky(dot(y, wa) + ba)
        t = dot(t, wb) + bb
        y = _leaky(y + t)
    # y1 = leaky_relu(w2(y1))
    y = _leaky(dot(y, w2) + b2)
    # y1 = w3(y1): (padded) 128 -> 1.  An N=1 MXU matmul wastes the systolic
    # array; do it as a VPU multiply + lane reduction (XLU) instead.
    out = jnp.sum(y * w3_row, axis=-1, keepdims=True) + b3
    return out


def _critic_kernel(x_ref,
                   w1, b1,
                   s1aw, s1ab, s1bw, s1bb,
                   s2aw, s2ab, s2bw, s2bb,
                   s3aw, s3ab, s3bw, s3bb,
                   w2, b2, w3_row, b3,
                   o_ref, *, compute_dtype):
    stages = ((s1aw[...], s1ab[...], s1bw[...], s1bb[...]),
              (s2aw[...], s2ab[...], s2bw[...], s2bb[...]),
              (s3aw[...], s3ab[...], s3bw[...], s3bb[...]))
    out = _mlp_math(x_ref[...], w1[...], b1[...], stages,
                    w2[...], b2[...], w3_row[...], b3[...],
                    compute_dtype=compute_dtype)
    o_ref[...] = out.astype(o_ref.dtype)


def _pack_params(params, pad, compute_dtype):
    """Transpose weights to [in, out], zero-pad every dim to a lane (128)
    multiple, cast matmul weights to `compute_dtype`.  Biases stay f32 (they
    add into the f32 accumulator).  Returns (args, padded_input, padded_hidden).
    """
    input_size = 16 * 3 * (pad * 2)
    di_p = _round_up(input_size, 128)
    lin = params["w1"][0].shape[0]          # linear_size (w1 is [out, in])
    lp = _round_up(lin, 128)
    hp = _round_up(100, 128)                # w2 output width

    def pack(name, in_p, out_p):
        w, b = params[name]                 # w: [out, in], b: [out]
        wt = jnp.zeros((in_p, out_p), compute_dtype)
        wt = wt.at[:w.shape[1], :w.shape[0]].set(w.T.astype(compute_dtype))
        bp = jnp.zeros((1, out_p), jnp.float32).at[:, :b.shape[0]].set(b[None, :])
        return wt, bp

    args = []
    args += pack("w1", di_p, lp)
    for name in ("s1a", "s1b", "s2a", "s2b", "s3a", "s3b"):
        args += pack(name, lp, lp)
    args += pack("w2", lp, hp)
    # w3 ([1, 100]) is used on the VPU as a broadcast row; keep it f32.
    w3, b3 = params["w3"]
    w3_row = jnp.zeros((1, hp), jnp.float32).at[:, :w3.shape[1]].set(
        w3.astype(jnp.float32))
    args += [w3_row, b3.reshape(1, 1).astype(jnp.float32)]
    return args, di_p, lp


def _preprocess(x, pad):
    """x: [B, 2*pad+1, 48] (or flattened) -> x_in: [B, 16*3*(2*pad)]."""
    if x.ndim != 3:
        x = x.reshape(-1, 2 * pad + 1, 48)
    center = x[:, pad:pad + 1, :]
    x1 = x[:, :pad, :] - center
    x3 = x[:, pad + 1:, :] - center
    return jnp.concatenate([x1, x3], axis=1).reshape(x.shape[0], -1)


@functools.partial(jax.jit, static_argnames=("pad", "block_b", "compute_dtype",
                                             "single_buffer_weights"))
def temporal_critic_forward(x, params, *, pad, block_b=None,
                            compute_dtype=jnp.bfloat16,
                            single_buffer_weights=True):
    x_in = _preprocess(x, pad).astype(jnp.float32)
    B, input_size = x_in.shape

    weight_args, di_p, lp = _pack_params(params, pad, compute_dtype)

    # Zero-pad the input features to a lane multiple and cast to the MXU dtype.
    x_pad = jnp.zeros((B, di_p), compute_dtype).at[:, :input_size].set(
        x_in.astype(compute_dtype))

    # Batch tiling: a single tile for small B, 256-row tiles otherwise.
    if block_b is None:
        block_b = _round_up(B, 8) if B <= 256 else 256
    b_pad = _round_up(B, block_b)
    if b_pad != B:
        x_pad = jnp.pad(x_pad, ((0, b_pad - B), (0, 0)))
    grid = (b_pad // block_b,)

    x_spec = pl.BlockSpec((block_b, di_p), lambda i: (i, 0))
    out_spec = pl.BlockSpec((block_b, 1), lambda i: (i, 0))
    if single_buffer_weights:
        # Weights are grid-invariant -> no need for double-buffering in VMEM.
        w_specs = [pl.BlockSpec(a.shape, lambda i: (0, 0),
                                pipeline_mode=pl.Buffered(1))
                   for a in weight_args]
    else:
        w_specs = [pl.BlockSpec(a.shape, lambda i: (0, 0)) for a in weight_args]

    # Explicit VMEM budget: resident weights + double-buffered x/out tiles +
    # in-kernel f32 intermediates, with headroom; capped at v7x's 64 MiB / TC.
    n_wbuf = 1 if single_buffer_weights else 2
    weight_bytes = n_wbuf * sum(int(a.size) * jnp.dtype(a.dtype).itemsize
                                for a in weight_args)
    c_item = jnp.dtype(compute_dtype).itemsize
    io_bytes = 2 * block_b * (di_p * c_item + 4)
    tmp_bytes = 8 * block_b * max(di_p, lp, 128) * 4
    vmem_limit = max(int(1.2 * (weight_bytes + io_bytes + tmp_bytes)) + (2 << 20),
                     16 << 20)
    vmem_limit = min(vmem_limit, 64 << 20)

    out = pl.pallas_call(
        functools.partial(_critic_kernel, compute_dtype=compute_dtype),
        out_shape=jax.ShapeDtypeStruct((b_pad, 1), jnp.float32),
        grid=grid,
        in_specs=[x_spec] + w_specs,
        out_specs=out_spec,
        compiler_params=pltpu.CompilerParams(
            dimension_semantics=("parallel",),
            vmem_limit_bytes=vmem_limit),
    )(x_pad, *weight_args)
    return out[:B]


def init_params(key, pad, linear_size):
    """Deterministic PyTorch-style (uniform +/- 1/sqrt(fan_in)) init."""
    input_size = 16 * 3 * (pad * 2)
    layer_dims = [
        ("w1", input_size, linear_size),
        ("s1a", linear_size, linear_size), ("s1b", linear_size, linear_size),
        ("s2a", linear_size, linear_size), ("s2b", linear_size, linear_size),
        ("s3a", linear_size, linear_size), ("s3b", linear_size, linear_size),
        ("w2", linear_size, 100),
        ("w3", 100, 1),
    ]
    params = {}
    for name, in_f, out_f in layer_dims:
        key, kw, kb = jax.random.split(key, 3)
        bound = 1.0 / jnp.sqrt(jnp.float32(in_f))
        w = jax.random.uniform(kw, (out_f, in_f), jnp.float32, -bound, bound)
        b = jax.random.uniform(kb, (out_f,), jnp.float32, -bound, bound)
        params[name] = (w, b)
    return params


def temporal_critic_reference(x, params, *, pad):
    """Pure f32 JAX reference mirroring the PyTorch forward exactly."""
    def lin(name, v):
        w, b = params[name]
        return v @ w.T + b

    y = _preprocess(x, pad).astype(jnp.float32)
    y = _leaky(lin("w1", y))
    for a, b in (("s1a", "s1b"), ("s2a", "s2b"), ("s3a", "s3b")):
        t = _leaky(lin(a, y))
        t = lin(b, t)
        y = _leaky(y + t)
    y = _leaky(lin("w2", y))
    y = lin("w3", y)
    return y


def temporal_critic_matched_reference(x, params, *, pad,
                                      compute_dtype=jnp.bfloat16):
    """Plain-JAX reference using the SAME packed/padded bf16 weights and
    f32-accumulate math as the kernel, for a tight numerical check."""
    weight_args, di_p, _ = _pack_params(params, pad, compute_dtype)
    x_in = _preprocess(x, pad).astype(jnp.float32)
    B, d = x_in.shape
    x_pad = jnp.zeros((B, di_p), compute_dtype).at[:, :d].set(
        x_in.astype(compute_dtype))
    w1, b1 = weight_args[0], weight_args[1]
    rest = weight_args[2:]
    stages = tuple((rest[4 * i], rest[4 * i + 1], rest[4 * i + 2],
                    rest[4 * i + 3]) for i in range(3))
    w2, b2, w3_row, b3 = rest[12:]
    return _mlp_math(x_pad, w1, b1, stages, w2, b2, w3_row, b3,
                     compute_dtype=compute_dtype)


if __name__ == "__main__":
    PAD = 2
    LINEAR_SIZE = 128   # small stand-in for the default 1000
    BATCH = 16

    key = jax.random.PRNGKey(0)
    key, kx, kp = jax.random.split(key, 3)

    x = jax.random.normal(kx, (BATCH, 2 * PAD + 1, 48), dtype=jnp.float32)
    params = init_params(kp, PAD, LINEAR_SIZE)

    try:
        out = jax.block_until_ready(
            temporal_critic_forward(x, params, pad=PAD,
                                    single_buffer_weights=True))
    except Exception:
        # pl.Buffered(1) not supported on this jax build -> fall back to the
        # default (double-buffered) weight specs; everything else unchanged.
        out = jax.block_until_ready(
            temporal_critic_forward(x, params, pad=PAD,
                                    single_buffer_weights=False))

    ref_f32 = temporal_critic_reference(x, params, pad=PAD)
    ref_bf16 = temporal_critic_matched_reference(x, params, pad=PAD)

    assert out.shape == (BATCH, 1)
    # Tight check against the reference that uses identical bf16-weight /
    # f32-accumulate math.
    assert jnp.allclose(out, ref_bf16, atol=5e-3, rtol=5e-3), (
        f"max abs err vs matched ref: {jnp.max(jnp.abs(out - ref_bf16))}")
    # Loose sanity check against the exact-f32 (PyTorch-equivalent) reference.
    assert jnp.allclose(out, ref_f32, atol=1e-1, rtol=1e-1), (
        f"max abs err vs f32 ref: {jnp.max(jnp.abs(out - ref_f32))}")

    print("KERNEL_OK")
</pallas_src>

<mosaic_0001>
module attributes {stable_mosaic.version = 11 : i64} {
  func.func @_critic_kernel(%arg0: i32, %arg1: memref<16x256xbf16, #tpu.memory_space<vmem>>, %arg2: memref<256x128xbf16, #tpu.memory_space<vmem>>, %arg3: memref<1x128xf32, #tpu.memory_space<vmem>>, %arg4: memref<128x128xbf16, #tpu.memory_space<vmem>>, %arg5: memref<1x128xf32, #tpu.memory_space<vmem>>, %arg6: memref<128x128xbf16, #tpu.memory_space<vmem>>, %arg7: memref<1x128xf32, #tpu.memory_space<vmem>>, %arg8: memref<128x128xbf16, #tpu.memory_space<vmem>>, %arg9: memref<1x128xf32, #tpu.memory_space<vmem>>, %arg10: memref<128x128xbf16, #tpu.memory_space<vmem>>, %arg11: memref<1x128xf32, #tpu.memory_space<vmem>>, %arg12: memref<128x128xbf16, #tpu.memory_space<vmem>>, %arg13: memref<1x128xf32, #tpu.memory_space<vmem>>, %arg14: memref<128x128xbf16, #tpu.memory_space<vmem>>, %arg15: memref<1x128xf32, #tpu.memory_space<vmem>>, %arg16: memref<128x128xbf16, #tpu.memory_space<vmem>>, %arg17: memref<1x128xf32, #tpu.memory_space<vmem>>, %arg18: memref<1x128xf32, #tpu.memory_space<vmem>>, %arg19: memref<1x1xf32, #tpu.memory_space<vmem>>, %arg20: memref<16x1xf32, #tpu.memory_space<vmem>>) attributes {dimension_semantics = [#tpu.dimension_semantics<parallel>], iteration_bounds = array<i64: 1>, scalar_prefetch = 0 : i64, scratch_operands = 0 : i64, tpu.core_type = #tpu.core_type<tc>, window_params = [{transform_indices = @transform_0, window_bounds = array<i64: 16, 256>}, {pipeline_mode = #tpu.pipeline_mode<synchronous>, transform_indices = @transform_1, window_bounds = array<i64: 256, 128>}, {pipeline_mode = #tpu.pipeline_mode<synchronous>, transform_indices = @transform_2, window_bounds = array<i64: 1, 128>}, {pipeline_mode = #tpu.pipeline_mode<synchronous>, transform_indices = @transform_3, window_bounds = array<i64: 128, 128>}, {pipeline_mode = #tpu.pipeline_mode<synchronous>, transform_indices = @transform_4, window_bounds = array<i64: 1, 128>}, {pipeline_mode = #tpu.pipeline_mode<synchronous>, transform_indices = @transform_5, window_bounds = array<i64: 128, 128>}, {pipeline_mode = #tpu.pipeline_mode<synchronous>, transform_indices = @transform_6, window_bounds = array<i64: 1, 128>}, {pipeline_mode = #tpu.pipeline_mode<synchronous>, transform_indices = @transform_7, window_bounds = array<i64: 128, 128>}, {pipeline_mode = #tpu.pipeline_mode<synchronous>, transform_indices = @transform_8, window_bounds = array<i64: 1, 128>}, {pipeline_mode = #tpu.pipeline_mode<synchronous>, transform_indices = @transform_9, window_bounds = array<i64: 128, 128>}, {pipeline_mode = #tpu.pipeline_mode<synchronous>, transform_indices = @transform_10, window_bounds = array<i64: 1, 128>}, {pipeline_mode = #tpu.pipeline_mode<synchronous>, transform_indices = @transform_11, window_bounds = array<i64: 128, 128>}, {pipeline_mode = #tpu.pipeline_mode<synchronous>, transform_indices = @transform_12, window_bounds = array<i64: 1, 128>}, {pipeline_mode = #tpu.pipeline_mode<synchronous>, transform_indices = @transform_13, window_bounds = array<i64: 128, 128>}, {pipeline_mode = #tpu.pipeline_mode<synchronous>, transform_indices = @transform_14, window_bounds = array<i64: 1, 128>}, {pipeline_mode = #tpu.pipeline_mode<synchronous>, transform_indices = @transform_15, window_bounds = array<i64: 128, 128>}, {pipeline_mode = #tpu.pipeline_mode<synchronous>, transform_indices = @transform_16, window_bounds = array<i64: 1, 128>}, {pipeline_mode = #tpu.pipeline_mode<synchronous>, transform_indices = @transform_17, window_bounds = array<i64: 1, 128>}, {pipeline_mode = #tpu.pipeline_mode<synchronous>, transform_indices = @transform_18, window_bounds = array<i64: 1, 1>}, {transform_indices = @transform_19, window_bounds = array<i64: 16, 1>}]} {
    %c0 = arith.constant 0 : index
    %c0_0 = arith.constant 0 : index
    %0 = vector.load %arg4[%c0, %c0_0] : memref<128x128xbf16, #tpu.memory_space<vmem>>, vector<128x128xbf16>
    %c0_1 = arith.constant 0 : index
    %c0_2 = arith.constant 0 : index
    %1 = vector.load %arg5[%c0_1, %c0_2] : memref<1x128xf32, #tpu.memory_space<vmem>>, vector<1x128xf32>
    %c0_3 = arith.constant 0 : index
    %c0_4 = arith.constant 0 : index
    %2 = vector.load %arg6[%c0_3, %c0_4] : memref<128x128xbf16, #tpu.memory_space<vmem>>, vector<128x128xbf16>
    %c0_5 = arith.constant 0 : index
    %c0_6 = arith.constant 0 : index
    %3 = vector.load %arg7[%c0_5, %c0_6] : memref<1x128xf32, #tpu.memory_space<vmem>>, vector<1x128xf32>
    %c0_7 = arith.constant 0 : index
    %c0_8 = arith.constant 0 : index
    %4 = vector.load %arg8[%c0_7, %c0_8] : memref<128x128xbf16, #tpu.memory_space<vmem>>, vector<128x128xbf16>
    %c0_9 = arith.constant 0 : index
    %c0_10 = arith.constant 0 : index
    %5 = vector.load %arg9[%c0_9, %c0_10] : memref<1x128xf32, #tpu.memory_space<vmem>>, vector<1x128xf32>
    %c0_11 = arith.constant 0 : index
    %c0_12 = arith.constant 0 : index
    %6 = vector.load %arg10[%c0_11, %c0_12] : memref<128x128xbf16, #tpu.memory_space<vmem>>, vector<128x128xbf16>
    %c0_13 = arith.constant 0 : index
    %c0_14 = arith.constant 0 : index
    %7 = vector.load %arg11[%c0_13, %c0_14] : memref<1x128xf32, #tpu.memory_space<vmem>>, vector<1x128xf32>
    %c0_15 = arith.constant 0 : index
    %c0_16 = arith.constant 0 : index
    %8 = vector.load %arg12[%c0_15, %c0_16] : memref<128x128xbf16, #tpu.memory_space<vmem>>, vector<128x128xbf16>
    %c0_17 = arith.constant 0 : index
    %c0_18 = arith.constant 0 : index
    %9 = vector.load %arg13[%c0_17, %c0_18] : memref<1x128xf32, #tpu.memory_space<vmem>>, vector<1x128xf32>
    %c0_19 = arith.constant 0 : index
    %c0_20 = arith.constant 0 : index
    %10 = vector.load %arg14[%c0_19, %c0_20] : memref<128x128xbf16, #tpu.memory_space<vmem>>, vector<128x128xbf16>
    %c0_21 = arith.constant 0 : index
    %c0_22 = arith.constant 0 : index
    %11 = vector.load %arg15[%c0_21, %c0_22] : memref<1x128xf32, #tpu.memory_space<vmem>>, vector<1x128xf32>
    %c0_23 = arith.constant 0 : index
    %c0_24 = arith.constant 0 : index
    %12 = vector.load %arg1[%c0_23, %c0_24] : memref<16x256xbf16, #tpu.memory_space<vmem>>, vector<16x256xbf16>
    %c0_25 = arith.constant 0 : index
    %c0_26 = arith.constant 0 : index
    %13 = vector.load %arg2[%c0_25, %c0_26] : memref<256x128xbf16, #tpu.memory_space<vmem>>, vector<256x128xbf16>
    %c0_27 = arith.constant 0 : index
    %c0_28 = arith.constant 0 : index
    %14 = vector.load %arg3[%c0_27, %c0_28] : memref<1x128xf32, #tpu.memory_space<vmem>>, vector<1x128xf32>
    %c0_29 = arith.constant 0 : index
    %c0_30 = arith.constant 0 : index
    %15 = vector.load %arg16[%c0_29, %c0_30] : memref<128x128xbf16, #tpu.memory_space<vmem>>, vector<128x128xbf16>
    %c0_31 = arith.constant 0 : index
    %c0_32 = arith.constant 0 : index
    %16 = vector.load %arg17[%c0_31, %c0_32] : memref<1x128xf32, #tpu.memory_space<vmem>>, vector<1x128xf32>
    %c0_33 = arith.constant 0 : index
    %c0_34 = arith.constant 0 : index
    %17 = vector.load %arg18[%c0_33, %c0_34] : memref<1x128xf32, #tpu.memory_space<vmem>>, vector<1x128xf32>
    %c0_35 = arith.constant 0 : index
    %c0_36 = arith.constant 0 : index
    %18 = vector.load %arg19[%c0_35, %c0_36] : memref<1x1xf32, #tpu.memory_space<vmem>>, vector<1x1xf32>
    %cst = arith.constant dense<0.000000e+00> : vector<16x128xf32>
    %19 = tpu.matmul %12, %13, %cst {dimension_numbers = #tpu.dot_dimension_numbers<[1], [0], [0], [1], [0, 0, 1, 1], [], []>} : vector<16x256xbf16>, vector<256x128xbf16>, vector<16x128xf32> -> vector<16x128xf32>
    %20 = vector.broadcast %14 : vector<1x128xf32> to vector<16x128xf32>
    %21 = arith.addf %19, %20 : vector<16x128xf32>
    %cst_37 = arith.constant 0.00999999977 : f32
    %22 = vector.broadcast %cst_37 : f32 to vector<16x128xf32>
    %23 = arith.mulf %22, %21 : vector<16x128xf32>
    %24 = arith.maximumf %21, %23 : vector<16x128xf32>
    %25 = arith.truncf %24 : vector<16x128xf32> to vector<16x128xbf16>
    %cst_38 = arith.constant dense<0.000000e+00> : vector<16x128xf32>
    %26 = tpu.matmul %25, %0, %cst_38 {dimension_numbers = #tpu.dot_dimension_numbers<[1], [0], [0], [1], [0, 0, 1, 1], [], []>} : vector<16x128xbf16>, vector<128x128xbf16>, vector<16x128xf32> -> vector<16x128xf32>
    %27 = vector.broadcast %1 : vector<1x128xf32> to vector<16x128xf32>
    %28 = arith.addf %26, %27 : vector<16x128xf32>
    %cst_39 = arith.constant 0.00999999977 : f32
    %29 = vector.broadcast %cst_39 : f32 to vector<16x128xf32>
    %30 = arith.mulf %29, %28 : vector<16x128xf32>
    %31 = arith.maximumf %28, %30 : vector<16x128xf32>
    %32 = arith.truncf %31 : vector<16x128xf32> to vector<16x128xbf16>
    %cst_40 = arith.constant dense<0.000000e+00> : vector<16x128xf32>
    %33 = tpu.matmul %32, %2, %cst_40 {dimension_numbers = #tpu.dot_dimension_numbers<[1], [0], [0], [1], [0, 0, 1, 1], [], []>} : vector<16x128xbf16>, vector<128x128xbf16>, vector<16x128xf32> -> vector<16x128xf32>
    %34 = vector.broadcast %3 : vector<1x128xf32> to vector<16x128xf32>
    %35 = arith.addf %33, %34 : vector<16x128xf32>
    %36 = arith.addf %24, %35 : vector<16x128xf32>
    %cst_41 = arith.constant 0.00999999977 : f32
    %37 = vector.broadcast %cst_41 : f32 to vector<16x128xf32>
    %38 = arith.mulf %37, %36 : vector<16x128xf32>
    %39 = arith.maximumf %36, %38 : vector<16x128xf32>
    %40 = arith.truncf %39 : vector<16x128xf32> to vector<16x128xbf16>
    %cst_42 = arith.constant dense<0.000000e+00> : vector<16x128xf32>
    %41 = tpu.matmul %40, %4, %cst_42 {dimension_numbers = #tpu.dot_dimension_numbers<[1], [0], [0], [1], [0, 0, 1, 1], [], []>} : vector<16x128xbf16>, vector<128x128xbf16>, vector<16x128xf32> -> vector<16x128xf32>
    %42 = vector.broadcast %5 : vector<1x128xf32> to vector<16x128xf32>
    %43 = arith.addf %41, %42 : vector<16x128xf32>
    %cst_43 = arith.constant 0.00999999977 : f32
    %44 = vector.broadcast %cst_43 : f32 to vector<16x128xf32>
    %45 = arith.mulf %44, %43 : vector<16x128xf32>
    %46 = arith.maximumf %43, %45 : vector<16x128xf32>
    %47 = arith.truncf %46 : vector<16x128xf32> to vector<16x128xbf16>
    %cst_44 = arith.constant dense<0.000000e+00> : vector<16x128xf32>
    %48 = tpu.matmul %47, %6, %cst_44 {dimension_numbers = #tpu.dot_dimension_numbers<[1], [0], [0], [1], [0, 0, 1, 1], [], []>} : vector<16x128xbf16>, vector<128x128xbf16>, vector<16x128xf32> -> vector<16x128xf32>
    %49 = vector.broadcast %7 : vector<1x128xf32> to vector<16x128xf32>
    %50 = arith.addf %48, %49 : vector<16x128xf32>
    %51 = arith.addf %39, %50 : vector<16x128xf32>
    %cst_45 = arith.constant 0.00999999977 : f32
    %52 = vector.broadcast %cst_45 : f32 to vector<16x128xf32>
    %53 = arith.mulf %52, %51 : vector<16x128xf32>
    %54 = arith.maximumf %51, %53 : vector<16x128xf32>
    %55 = arith.truncf %54 : vector<16x128xf32> to vector<16x128xbf16>
    %cst_46 = arith.constant dense<0.000000e+00> : vector<16x128xf32>
    %56 = tpu.matmul %55, %8, %cst_46 {dimension_numbers = #tpu.dot_dimension_numbers<[1], [0], [0], [1], [0, 0, 1, 1], [], []>} : vector<16x128xbf16>, vector<128x128xbf16>, vector<16x128xf32> -> vector<16x128xf32>
    %57 = vector.broadcast %9 : vector<1x128xf32> to vector<16x128xf32>
    %58 = arith.addf %56, %57 : vector<16x128xf32>
    %cst_47 = arith.constant 0.00999999977 : f32
    %59 = vector.broadcast %cst_47 : f32 to vector<16x128xf32>
    %60 = arith.mulf %59, %58 : vector<16x128xf32>
    %61 = arith.maximumf %58, %60 : vector<16x128xf32>
    %62 = arith.truncf %61 : vector<16x128xf32> to vector<16x128xbf16>
    %cst_48 = arith.constant dense<0.000000e+00> : vector<16x128xf32>
    %63 = tpu.matmul %62, %10, %cst_48 {dimension_numbers = #tpu.dot_dimension_numbers<[1], [0], [0], [1], [0, 0, 1, 1], [], []>} : vector<16x128xbf16>, vector<128x128xbf16>, vector<16x128xf32> -> vector<16x128xf32>
    %64 = vector.broadcast %11 : vector<1x128xf32> to vector<16x128xf32>
    %65 = arith.addf %63, %64 : vector<16x128xf32>
    %66 = arith.addf %54, %65 : vector<16x128xf32>
    %cst_49 = arith.constant 0.00999999977 : f32
    %67 = vector.broadcast %cst_49 : f32 to vector<16x128xf32>
    %68 = arith.mulf %67, %66 : vector<16x128xf32>
    %69 = arith.maximumf %66, %68 : vector<16x128xf32>
    %70 = arith.truncf %69 : vector<16x128xf32> to vector<16x128xbf16>
    %cst_50 = arith.constant dense<0.000000e+00> : vector<16x128xf32>
    %71 = tpu.matmul %70, %15, %cst_50 {dimension_numbers = #tpu.dot_dimension_numbers<[1], [0], [0], [1], [0, 0, 1, 1], [], []>} : vector<16x128xbf16>, vector<128x128xbf16>, vector<16x128xf32> -> vector<16x128xf32>
    %72 = vector.broadcast %16 : vector<1x128xf32> to vector<16x128xf32>
    %73 = arith.addf %71, %72 : vector<16x128xf32>
    %cst_51 = arith.constant 0.00999999977 : f32
    %74 = vector.broadcast %cst_51 : f32 to vector<16x128xf32>
    %75 = arith.mulf %74, %73 : vector<16x128xf32>
    %76 = arith.maximumf %73, %75 : vector<16x128xf32>
    %77 = vector.broadcast %17 : vector<1x128xf32> to vector<16x128xf32>
    %78 = arith.mulf %76, %77 : vector<16x128xf32>
    %cst_52 = arith.constant dense<0.000000e+00> : vector<16xf32>
    %79 = vector.multi_reduction <add>, %78, %cst_52 [1] : vector<16x128xf32> to vector<16xf32>
    %80 = vector.shape_cast %79 : vector<16xf32> to vector<16x1xf32>
    %81 = vector.broadcast %18 : vector<1x1xf32> to vector<16x1xf32>
    %82 = arith.addf %80, %81 : vector<16x1xf32>
    %c0_53 = arith.constant 0 : index
    %c0_54 = arith.constant 0 : index
    %83 = vector.load %arg20[%c0_53, %c0_54] : memref<16x1xf32, #tpu.memory_space<vmem>>, vector<16x1xf32>
    tpu.vector_store %arg20[%c0_53, %c0_54], %82 {strides = array<i32>} : memref<16x1xf32, #tpu.memory_space<vmem>>, vector<16x1xf32>,
    return
  }
  func.func @transform_0(%arg0: i32) -> (i32, i32) {
    %c0_i32 = arith.constant 0 : i32
    %c0_i32_0 = arith.constant 0 : i32
    return %arg0, %c0_i32 : i32, i32
  }
  func.func @transform_1(%arg0: i32) -> (i32, i32) {
    %c0_i32 = arith.constant 0 : i32
    %c0_i32_0 = arith.constant 0 : i32
    %c0_i32_1 = arith.constant 0 : i32
    return %c0_i32, %c0_i32_0 : i32, i32
  }
  func.func @transform_2(%arg0: i32) -> (i32, i32) {
    %c0_i32 = arith.constant 0 : i32
    %c0_i32_0 = arith.constant 0 : i32
    %c0_i32_1 = arith.constant 0 : i32
    return %c0_i32, %c0_i32_0 : i32, i32
  }
  func.func @transform_3(%arg0: i32) -> (i32, i32) {
    %c0_i32 = arith.constant 0 : i32
    %c0_i32_0 = arith.constant 0 : i32
    %c0_i32_1 = arith.constant 0 : i32
    return %c0_i32, %c0_i32_0 : i32, i32
  }
  func.func @transform_4(%arg0: i32) -> (i32, i32) {
    %c0_i32 = arith.constant 0 : i32
    %c0_i32_0 = arith.constant 0 : i32
    %c0_i32_1 = arith.constant 0 : i32
    return %c0_i32, %c0_i32_0 : i32, i32
  }
  func.func @transform_5(%arg0: i32) -> (i32, i32) {
    %c0_i32 = arith.constant 0 : i32
    %c0_i32_0 = arith.constant 0 : i32
    %c0_i32_1 = arith.constant 0 : i32
    return %c0_i32, %c0_i32_0 : i32, i32
  }
  func.func @transform_6(%arg0: i32) -> (i32, i32) {
    %c0_i32 = arith.constant 0 : i32
    %c0_i32_0 = arith.constant 0 : i32
    %c0_i32_1 = arith.constant 0 : i32
    return %c0_i32, %c0_i32_0 : i32, i32
  }
  func.func @transform_7(%arg0: i32) -> (i32, i32) {
    %c0_i32 = arith.constant 0 : i32
    %c0_i32_0 = arith.constant 0 : i32
    %c0_i32_1 = arith.constant 0 : i32
    return %c0_i32, %c0_i32_0 : i32, i32
  }
  func.func @transform_8(%arg0: i32) -> (i32, i32) {
    %c0_i32 = arith.constant 0 : i32
    %c0_i32_0 = arith.constant 0 : i32
    %c0_i32_1 = arith.constant 0 : i32
    return %c0_i32, %c0_i32_0 : i32, i32
  }
  func.func @transform_9(%arg0: i32) -> (i32, i32) {
    %c0_i32 = arith.constant 0 : i32
    %c0_i32_0 = arith.constant 0 : i32
    %c0_i32_1 = arith.constant 0 : i32
    return %c0_i32, %c0_i32_0 : i32, i32
  }
  func.func @transform_10(%arg0: i32) -> (i32, i32) {
    %c0_i32 = arith.constant 0 : i32
    %c0_i32_0 = arith.constant 0 : i32
    %c0_i32_1 = arith.constant 0 : i32
    return %c0_i32, %c0_i32_0 : i32, i32
  }
  func.func @transform_11(%arg0: i32) -> (i32, i32) {
    %c0_i32 = arith.constant 0 : i32
    %c0_i32_0 = arith.constant 0 : i32
    %c0_i32_1 = arith.constant 0 : i32
    return %c0_i32, %c0_i32_0 : i32, i32
  }
  func.func @transform_12(%arg0: i32) -> (i32, i32) {
    %c0_i32 = arith.constant 0 : i32
    %c0_i32_0 = arith.constant 0 : i32
    %c0_i32_1 = arith.constant 0 : i32
    return %c0_i32, %c0_i32_0 : i32, i32
  }
  func.func @transform_13(%arg0: i32) -> (i32, i32) {
    %c0_i32 = arith.constant 0 : i32
    %c0_i32_0 = arith.constant 0 : i32
    %c0_i32_1 = arith.constant 0 : i32
    return %c0_i32, %c0_i32_0 : i32, i32
  }
  func.func @transform_14(%arg0: i32) -> (i32, i32) {
    %c0_i32 = arith.constant 0 : i32
    %c0_i32_0 = arith.constant 0 : i32
    %c0_i32_1 = arith.constant 0 : i32
    return %c0_i32, %c0_i32_0 : i32, i32
  }
  func.func @transform_15(%arg0: i32) -> (i32, i32) {
    %c0_i32 = arith.constant 0 : i32
    %c0_i32_0 = arith.constant 0 : i32
    %c0_i32_1 = arith.constant 0 : i32
    return %c0_i32, %c0_i32_0 : i32, i32
  }
  func.func @transform_16(%arg0: i32) -> (i32, i32) {
    %c0_i32 = arith.constant 0 : i32
    %c0_i32_0 = arith.constant 0 : i32
    %c0_i32_1 = arith.constant 0 : i32
    return %c0_i32, %c0_i32_0 : i32, i32
  }
  func.func @transform_17(%arg0: i32) -> (i32, i32) {
    %c0_i32 = arith.constant 0 : i32
    %c0_i32_0 = arith.constant 0 : i32
    %c0_i32_1 = arith.constant 0 : i32
    return %c0_i32, %c0_i32_0 : i32, i32
  }
  func.func @transform_18(%arg0: i32) -> (i32, i32) {
    %c0_i32 = arith.constant 0 : i32
    %c0_i32_0 = arith.constant 0 : i32
    %c0_i32_1 = arith.constant 0 : i32
    return %c0_i32, %c0_i32_0 : i32, i32
  }
  func.func @transform_19(%arg0: i32) -> (i32, i32) {
    %c0_i32 = arith.constant 0 : i32
    %c0_i32_0 = arith.constant 0 : i32
    return %arg0, %c0_i32 : i32, i32
  }
}

module attributes {stable_mosaic.version = 11 : i64} {
  func.func @_critic_kernel(%arg0: i32, %arg1: memref<16x256xbf16, #tpu.memory_space<vmem>>, %arg2: memref<256x128xbf16, #tpu.memory_space<vmem>>, %arg3: memref<1x128xf32, #tpu.memory_space<vmem>>, %arg4: memref<128x128xbf16, #tpu.memory_space<vmem>>, %arg5: memref<1x128xf32, #tpu.memory_space<vmem>>, %arg6: memref<128x128xbf16, #tpu.memory_space<vmem>>, %arg7: memref<1x128xf32, #tpu.memory_space<vmem>>, %arg8: memref<128x128xbf16, #tpu.memory_space<vmem>>, %arg9: memref<1x128xf32, #tpu.memory_space<vmem>>, %arg10: memref<128x128xbf16, #tpu.memory_space<vmem>>, %arg11: memref<1x128xf32, #tpu.memory_space<vmem>>, %arg12: memref<128x128xbf16, #tpu.memory_space<vmem>>, %arg13: memref<1x128xf32, #tpu.memory_space<vmem>>, %arg14: memref<128x128xbf16, #tpu.memory_space<vmem>>, %arg15: memref<1x128xf32, #tpu.memory_space<vmem>>, %arg16: memref<128x128xbf16, #tpu.memory_space<vmem>>, %arg17: memref<1x128xf32, #tpu.memory_space<vmem>>, %arg18: memref<1x128xf32, #tpu.memory_space<vmem>>, %arg19: memref<1x1xf32, #tpu.memory_space<vmem>>, %arg20: memref<16x1xf32, #tpu.memory_space<vmem>>) attributes {dimension_semantics = [#tpu.dimension_semantics<parallel>], iteration_bounds = array<i64: 1>, scalar_prefetch = 0 : i64, scratch_operands = 0 : i64, tpu.core_type = #tpu.core_type<tc>, window_params = [{transform_indices = @transform_0, window_bounds = array<i64: 16, 256>}, {pipeline_mode = #tpu.pipeline_mode<synchronous>, transform_indices = @transform_1, window_bounds = array<i64: 256, 128>}, {pipeline_mode = #tpu.pipeline_mode<synchronous>, transform_indices = @transform_2, window_bounds = array<i64: 1, 128>}, {pipeline_mode = #tpu.pipeline_mode<synchronous>, transform_indices = @transform_3, window_bounds = array<i64: 128, 128>}, {pipeline_mode = #tpu.pipeline_mode<synchronous>, transform_indices = @transform_4, window_bounds = array<i64: 1, 128>}, {pipeline_mode = #tpu.pipeline_mode<synchronous>, transform_indices = @transform_5, window_bounds = array<i64: 128, 128>}, {pipeline_mode = #tpu.pipeline_mode<synchronous>, transform_indices = @transform_6, window_bounds = array<i64: 1, 128>}, {pipeline_mode = #tpu.pipeline_mode<synchronous>, transform_indices = @transform_7, window_bounds = array<i64: 128, 128>}, {pipeline_mode = #tpu.pipeline_mode<synchronous>, transform_indices = @transform_8, window_bounds = array<i64: 1, 128>}, {pipeline_mode = #tpu.pipeline_mode<synchronous>, transform_indices = @transform_9, window_bounds = array<i64: 128, 128>}, {pipeline_mode = #tpu.pipeline_mode<synchronous>, transform_indices = @transform_10, window_bounds = array<i64: 1, 128>}, {pipeline_mode = #tpu.pipeline_mode<synchronous>, transform_indices = @transform_11, window_bounds = array<i64: 128, 128>}, {pipeline_mode = #tpu.pipeline_mode<synchronous>, transform_indices = @transform_12, window_bounds = array<i64: 1, 128>}, {pipeline_mode = #tpu.pipeline_mode<synchronous>, transform_indices = @transform_13, window_bounds = array<i64: 128, 128>}, {pipeline_mode = #tpu.pipeline_mode<synchronous>, transform_indices = @transform_14, window_bounds = array<i64: 1, 128>}, {pipeline_mode = #tpu.pipeline_mode<synchronous>, transform_indices = @transform_15, window_bounds = array<i64: 128, 128>}, {pipeline_mode = #tpu.pipeline_mode<synchronous>, transform_indices = @transform_16, window_bounds = array<i64: 1, 128>}, {pipeline_mode = #tpu.pipeline_mode<synchronous>, transform_indices = @transform_17, window_bounds = array<i64: 1, 128>}, {pipeline_mode = #tpu.pipeline_mode<synchronous>, transform_indices = @transform_18, window_bounds = array<i64: 1, 1>}, {transform_indices = @transform_19, window_bounds = array<i64: 16, 1>}]} {
    %c0 = arith.constant 0 : index
    %c0_0 = arith.constant 0 : index
    %0 = vector.load %arg4[%c0, %c0_0] : memref<128x128xbf16, #tpu.memory_space<vmem>>, vector<128x128xbf16>
    %c0_1 = arith.constant 0 : index
    %c0_2 = arith.constant 0 : index
    %1 = vector.load %arg5[%c0_1, %c0_2] : memref<1x128xf32, #tpu.memory_space<vmem>>, vector<1x128xf32>
    %c0_3 = arith.constant 0 : index
    %c0_4 = arith.constant 0 : index
    %2 = vector.load %arg6[%c0_3, %c0_4] : memref<128x128xbf16, #tpu.memory_space<vmem>>, vector<128x128xbf16>
    %c0_5 = arith.constant 0 : index
    %c0_6 = arith.constant 0 : index
    %3 = vector.load %arg7[%c0_5, %c0_6] : memref<1x128xf32, #tpu.memory_space<vmem>>, vector<1x128xf32>
    %c0_7 = arith.constant 0 : index
    %c0_8 = arith.constant 0 : index
    %4 = vector.load %arg8[%c0_7, %c0_8] : memref<128x128xbf16, #tpu.memory_space<vmem>>, vector<128x128xbf16>
    %c0_9 = arith.constant 0 : index
    %c0_10 = arith.constant 0 : index
    %5 = vector.load %arg9[%c0_9, %c0_10] : memref<1x128xf32, #tpu.memory_space<vmem>>, vector<1x128xf32>
    %c0_11 = arith.constant 0 : index
    %c0_12 = arith.constant 0 : index
    %6 = vector.load %arg10[%c0_11, %c0_12] : memref<128x128xbf16, #tpu.memory_space<vmem>>, vector<128x128xbf16>
    %c0_13 = arith.constant 0 : index
    %c0_14 = arith.constant 0 : index
    %7 = vector.load %arg11[%c0_13, %c0_14] : memref<1x128xf32, #tpu.memory_space<vmem>>, vector<1x128xf32>
    %c0_15 = arith.constant 0 : index
    %c0_16 = arith.constant 0 : index
    %8 = vector.load %arg12[%c0_15, %c0_16] : memref<128x128xbf16, #tpu.memory_space<vmem>>, vector<128x128xbf16>
    %c0_17 = arith.constant 0 : index
    %c0_18 = arith.constant 0 : index
    %9 = vector.load %arg13[%c0_17, %c0_18] : memref<1x128xf32, #tpu.memory_space<vmem>>, vector<1x128xf32>
    %c0_19 = arith.constant 0 : index
    %c0_20 = arith.constant 0 : index
    %10 = vector.load %arg14[%c0_19, %c0_20] : memref<128x128xbf16, #tpu.memory_space<vmem>>, vector<128x128xbf16>
    %c0_21 = arith.constant 0 : index
    %c0_22 = arith.constant 0 : index
    %11 = vector.load %arg15[%c0_21, %c0_22] : memref<1x128xf32, #tpu.memory_space<vmem>>, vector<1x128xf32>
    %c0_23 = arith.constant 0 : index
    %c0_24 = arith.constant 0 : index
    %12 = vector.load %arg1[%c0_23, %c0_24] : memref<16x256xbf16, #tpu.memory_space<vmem>>, vector<16x256xbf16>
    %c0_25 = arith.constant 0 : index
    %c0_26 = arith.constant 0 : index
    %13 = vector.load %arg2[%c0_25, %c0_26] : memref<256x128xbf16, #tpu.memory_space<vmem>>, vector<256x128xbf16>
    %c0_27 = arith.constant 0 : index
    %c0_28 = arith.constant 0 : index
    %14 = vector.load %arg3[%c0_27, %c0_28] : memref<1x128xf32, #tpu.memory_space<vmem>>, vector<1x128xf32>
    %c0_29 = arith.constant 0 : index
    %c0_30 = arith.constant 0 : index
    %15 = vector.load %arg16[%c0_29, %c0_30] : memref<128x128xbf16, #tpu.memory_space<vmem>>, vector<128x128xbf16>
    %c0_31 = arith.constant 0 : index
    %c0_32 = arith.constant 0 : index
    %16 = vector.load %arg17[%c0_31, %c0_32] : memref<1x128xf32, #tpu.memory_space<vmem>>, vector<1x128xf32>
    %c0_33 = arith.constant 0 : index
    %c0_34 = arith.constant 0 : index
    %17 = vector.load %arg18[%c0_33, %c0_34] : memref<1x128xf32, #tpu.memory_space<vmem>>, vector<1x128xf32>
    %c0_35 = arith.constant 0 : index
    %c0_36 = arith.constant 0 : index
    %18 = vector.load %arg19[%c0_35, %c0_36] : memref<1x1xf32, #tpu.memory_space<vmem>>, vector<1x1xf32>
    %cst = arith.constant dense<0.000000e+00> : vector<16x128xf32>
    %19 = tpu.matmul %12, %13, %cst {dimension_numbers = #tpu.dot_dimension_numbers<[1], [0], [0], [1], [0, 0, 1, 1], [], []>} : vector<16x256xbf16>, vector<256x128xbf16>, vector<16x128xf32> -> vector<16x128xf32>
    %20 = vector.broadcast %14 : vector<1x128xf32> to vector<16x128xf32>
    %21 = arith.addf %19, %20 : vector<16x128xf32>
    %cst_37 = arith.constant 0.00999999977 : f32
    %22 = vector.broadcast %cst_37 : f32 to vector<16x128xf32>
    %23 = arith.mulf %22, %21 : vector<16x128xf32>
    %24 = arith.maximumf %21, %23 : vector<16x128xf32>
    %25 = arith.truncf %24 : vector<16x128xf32> to vector<16x128xbf16>
    %cst_38 = arith.constant dense<0.000000e+00> : vector<16x128xf32>
    %26 = tpu.matmul %25, %0, %cst_38 {dimension_numbers = #tpu.dot_dimension_numbers<[1], [0], [0], [1], [0, 0, 1, 1], [], []>} : vector<16x128xbf16>, vector<128x128xbf16>, vector<16x128xf32> -> vector<16x128xf32>
    %27 = vector.broadcast %1 : vector<1x128xf32> to vector<16x128xf32>
    %28 = arith.addf %26, %27 : vector<16x128xf32>
    %cst_39 = arith.constant 0.00999999977 : f32
    %29 = vector.broadcast %cst_39 : f32 to vector<16x128xf32>
    %30 = arith.mulf %29, %28 : vector<16x128xf32>
    %31 = arith.maximumf %28, %30 : vector<16x128xf32>
    %32 = arith.truncf %31 : vector<16x128xf32> to vector<16x128xbf16>
    %cst_40 = arith.constant dense<0.000000e+00> : vector<16x128xf32>
    %33 = tpu.matmul %32, %2, %cst_40 {dimension_numbers = #tpu.dot_dimension_numbers<[1], [0], [0], [1], [0, 0, 1, 1], [], []>} : vector<16x128xbf16>, vector<128x128xbf16>, vector<16x128xf32> -> vector<16x128xf32>
    %34 = vector.broadcast %3 : vector<1x128xf32> to vector<16x128xf32>
    %35 = arith.addf %33, %34 : vector<16x128xf32>
    %36 = arith.addf %24, %35 : vector<16x128xf32>
    %cst_41 = arith.constant 0.00999999977 : f32
    %37 = vector.broadcast %cst_41 : f32 to vector<16x128xf32>
    %38 = arith.mulf %37, %36 : vector<16x128xf32>
    %39 = arith.maximumf %36, %38 : vector<16x128xf32>
    %40 = arith.truncf %39 : vector<16x128xf32> to vector<16x128xbf16>
    %cst_42 = arith.constant dense<0.000000e+00> : vector<16x128xf32>
    %41 = tpu.matmul %40, %4, %cst_42 {dimension_numbers = #tpu.dot_dimension_numbers<[1], [0], [0], [1], [0, 0, 1, 1], [], []>} : vector<16x128xbf16>, vector<128x128xbf16>, vector<16x128xf32> -> vector<16x128xf32>
    %42 = vector.broadcast %5 : vector<1x128xf32> to vector<16x128xf32>
    %43 = arith.addf %41, %42 : vector<16x128xf32>
    %cst_43 = arith.constant 0.00999999977 : f32
    %44 = vector.broadcast %cst_43 : f32 to vector<16x128xf32>
    %45 = arith.mulf %44, %43 : vector<16x128xf32>
    %46 = arith.maximumf %43, %45 : vector<16x128xf32>
    %47 = arith.truncf %46 : vector<16x128xf32> to vector<16x128xbf16>
    %cst_44 = arith.constant dense<0.000000e+00> : vector<16x128xf32>
    %48 = tpu.matmul %47, %6, %cst_44 {dimension_numbers = #tpu.dot_dimension_numbers<[1], [0], [0], [1], [0, 0, 1, 1], [], []>} : vector<16x128xbf16>, vector<128x128xbf16>, vector<16x128xf32> -> vector<16x128xf32>
    %49 = vector.broadcast %7 : vector<1x128xf32> to vector<16x128xf32>
    %50 = arith.addf %48, %49 : vector<16x128xf32>
    %51 = arith.addf %39, %50 : vector<16x128xf32>
    %cst_45 = arith.constant 0.00999999977 : f32
    %52 = vector.broadcast %cst_45 : f32 to vector<16x128xf32>
    %53 = arith.mulf %52, %51 : vector<16x128xf32>
    %54 = arith.maximumf %51, %53 : vector<16x128xf32>
    %55 = arith.truncf %54 : vector<16x128xf32> to vector<16x128xbf16>
    %cst_46 = arith.constant dense<0.000000e+00> : vector<16x128xf32>
    %56 = tpu.matmul %55, %8, %cst_46 {dimension_numbers = #tpu.dot_dimension_numbers<[1], [0], [0], [1], [0, 0, 1, 1], [], []>} : vector<16x128xbf16>, vector<128x128xbf16>, vector<16x128xf32> -> vector<16x128xf32>
    %57 = vector.broadcast %9 : vector<1x128xf32> to vector<16x128xf32>
    %58 = arith.addf %56, %57 : vector<16x128xf32>
    %cst_47 = arith.constant 0.00999999977 : f32
    %59 = vector.broadcast %cst_47 : f32 to vector<16x128xf32>
    %60 = arith.mulf %59, %58 : vector<16x128xf32>
    %61 = arith.maximumf %58, %60 : vector<16x128xf32>
    %62 = arith.truncf %61 : vector<16x128xf32> to vector<16x128xbf16>
    %cst_48 = arith.constant dense<0.000000e+00> : vector<16x128xf32>
    %63 = tpu.matmul %62, %10, %cst_48 {dimension_numbers = #tpu.dot_dimension_numbers<[1], [0], [0], [1], [0, 0, 1, 1], [], []>} : vector<16x128xbf16>, vector<128x128xbf16>, vector<16x128xf32> -> vector<16x128xf32>
    %64 = vector.broadcast %11 : vector<1x128xf32> to vector<16x128xf32>
    %65 = arith.addf %63, %64 : vector<16x128xf32>
    %66 = arith.addf %54, %65 : vector<16x128xf32>
    %cst_49 = arith.constant 0.00999999977 : f32
    %67 = vector.broadcast %cst_49 : f32 to vector<16x128xf32>
    %68 = arith.mulf %67, %66 : vector<16x128xf32>
    %69 = arith.maximumf %66, %68 : vector<16x128xf32>
    %70 = arith.truncf %69 : vector<16x128xf32> to vector<16x128xbf16>
    %cst_50 = arith.constant dense<0.000000e+00> : vector<16x128xf32>
    %71 = tpu.matmul %70, %15, %cst_50 {dimension_numbers = #tpu.dot_dimension_numbers<[1], [0], [0], [1], [0, 0, 1, 1], [], []>} : vector<16x128xbf16>, vector<128x128xbf16>, vector<16x128xf32> -> vector<16x128xf32>
    %72 = vector.broadcast %16 : vector<1x128xf32> to vector<16x128xf32>
    %73 = arith.addf %71, %72 : vector<16x128xf32>
    %cst_51 = arith.constant 0.00999999977 : f32
    %74 = vector.broadcast %cst_51 : f32 to vector<16x128xf32>
    %75 = arith.mulf %74, %73 : vector<16x128xf32>
    %76 = arith.maximumf %73, %75 : vector<16x128xf32>
    %77 = vector.broadcast %17 : vector<1x128xf32> to vector<16x128xf32>
    %78 = arith.mulf %76, %77 : vector<16x128xf32>
    %cst_52 = arith.constant dense<0.000000e+00> : vector<16xf32>
    %79 = vector.multi_reduction <add>, %78, %cst_52 [1] : vector<16x128xf32> to vector<16xf32>
    %80 = vector.shape_cast %79 : vector<16xf32> to vector<16x1xf32>
    %81 = vector.broadcast %18 : vector<1x1xf32> to vector<16x1xf32>
    %82 = arith.addf %80, %81 : vector<16x1xf32>
    %c0_53 = arith.constant 0 : index
    %c0_54 = arith.constant 0 : index
    %83 = vector.load %arg20[%c0_53, %c0_54] : memref<16x1xf32, #tpu.memory_space<vmem>>, vector<16x1xf32>
    tpu.vector_store %arg20[%c0_53, %c0_54], %82 {strides = array<i32>} : memref<16x1xf32, #tpu.memory_space<vmem>>, vector<16x1xf32>,
    return
  }
  func.func @transform_0(%arg0: i32) -> (i32, i32) {
    %c0_i32 = arith.constant 0 : i32
    %c0_i32_0 = arith.constant 0 : i32
    return %arg0, %c0_i32 : i32, i32
  }
  func.func @transform_1(%arg0: i32) -> (i32, i32) {
    %c0_i32 = arith.constant 0 : i32
    %c0_i32_0 = arith.constant 0 : i32
    %c0_i32_1 = arith.constant 0 : i32
    return %c0_i32, %c0_i32_0 : i32, i32
  }
  func.func @transform_2(%arg0: i32) -> (i32, i32) {
    %c0_i32 = arith.constant 0 : i32
    %c0_i32_0 = arith.constant 0 : i32
    %c0_i32_1 = arith.constant 0 : i32
    return %c0_i32, %c0_i32_0 : i32, i32
  }
  func.func @transform_3(%arg0: i32) -> (i32, i32) {
    %c0_i32 = arith.constant 0 : i32
    %c0_i32_0 = arith.constant 0 : i32
    %c0_i32_1 = arith.constant 0 : i32
    return %c0_i32, %c0_i32_0 : i32, i32
  }
  func.func @transform_4(%arg0: i32) -> (i32, i32) {
    %c0_i32 = arith.constant 0 : i32
    %c0_i32_0 = arith.constant 0 : i32
    %c0_i32_1 = arith.constant 0 : i32
    return %c0_i32, %c0_i32_0 : i32, i32
  }
  func.func @transform_5(%arg0: i32) -> (i32, i32) {
    %c0_i32 = arith.constant 0 : i32
    %c0_i32_0 = arith.constant 0 : i32
    %c0_i32_1 = arith.constant 0 : i32
    return %c0_i32, %c0_i32_0 : i32, i32
  }
  func.func @transform_6(%arg0: i32) -> (i32, i32) {
    %c0_i32 = arith.constant 0 : i32
    %c0_i32_0 = arith.constant 0 : i32
    %c0_i32_1 = arith.constant 0 : i32
    return %c0_i32, %c0_i32_0 : i32, i32
  }
  func.func @transform_7(%arg0: i32) -> (i32, i32) {
    %c0_i32 = arith.constant 0 : i32
    %c0_i32_0 = arith.constant 0 : i32
    %c0_i32_1 = arith.constant 0 : i32
    return %c0_i32, %c0_i32_0 : i32, i32
  }
  func.func @transform_8(%arg0: i32) -> (i32, i32) {
    %c0_i32 = arith.constant 0 : i32
    %c0_i32_0 = arith.constant 0 : i32
    %c0_i32_1 = arith.constant 0 : i32
    return %c0_i32, %c0_i32_0 : i32, i32
  }
  func.func @transform_9(%arg0: i32) -> (i32, i32) {
    %c0_i32 = arith.constant 0 : i32
    %c0_i32_0 = arith.constant 0 : i32
    %c0_i32_1 = arith.constant 0 : i32
    return %c0_i32, %c0_i32_0 : i32, i32
  }
  func.func @transform_10(%arg0: i32) -> (i32, i32) {
    %c0_i32 = arith.constant 0 : i32
    %c0_i32_0 = arith.constant 0 : i32
    %c0_i32_1 = arith.constant 0 : i32
    return %c0_i32, %c0_i32_0 : i32, i32
  }
  func.func @transform_11(%arg0: i32) -> (i32, i32) {
    %c0_i32 = arith.constant 0 : i32
    %c0_i32_0 = arith.constant 0 : i32
    %c0_i32_1 = arith.constant 0 : i32
    return %c0_i32, %c0_i32_0 : i32, i32
  }
  func.func @transform_12(%arg0: i32) -> (i32, i32) {
    %c0_i32 = arith.constant 0 : i32
    %c0_i32_0 = arith.constant 0 : i32
    %c0_i32_1 = arith.constant 0 : i32
    return %c0_i32, %c0_i32_0 : i32, i32
  }
  func.func @transform_13(%arg0: i32) -> (i32, i32) {
    %c0_i32 = arith.constant 0 : i32
    %c0_i32_0 = arith.constant 0 : i32
    %c0_i32_1 = arith.constant 0 : i32
    return %c0_i32, %c0_i32_0 : i32, i32
  }
  func.func @transform_14(%arg0: i32) -> (i32, i32) {
    %c0_i32 = arith.constant 0 : i32
    %c0_i32_0 = arith.constant 0 : i32
    %c0_i32_1 = arith.constant 0 : i32
    return %c0_i32, %c0_i32_0 : i32, i32
  }
  func.func @transform_15(%arg0: i32) -> (i32, i32) {
    %c0_i32 = arith.constant 0 : i32
    %c0_i32_0 = arith.constant 0 : i32
    %c0_i32_1 = arith.constant 0 : i32
    return %c0_i32, %c0_i32_0 : i32, i32
  }
  func.func @transform_16(%arg0: i32) -> (i32, i32) {
    %c0_i32 = arith.constant 0 : i32
    %c0_i32_0 = arith.constant 0 : i32
    %c0_i32_1 = arith.constant 0 : i32
    return %c0_i32, %c0_i32_0 : i32, i32
  }
  func.func @transform_17(%arg0: i32) -> (i32, i32) {
    %c0_i32 = arith.constant 0 : i32
    %c0_i32_0 = arith.constant 0 : i32
    %c0_i32_1 = arith.constant 0 : i32
    return %c0_i32, %c0_i32_0 : i32, i32
  }
  func.func @transform_18(%arg0: i32) -> (i32, i32) {
    %c0_i32 = arith.constant 0 : i32
    %c0_i32_0 = arith.constant 0 : i32
    %c0_i32_1 = arith.constant 0 : i32
    return %c0_i32, %c0_i32_0 : i32, i32
  }
  func.func @transform_19(%arg0: i32) -> (i32, i32) {
    %c0_i32 = arith.constant 0 : i32
    %c0_i32_0 = arith.constant 0 : i32
    return %arg0, %c0_i32 : i32, i32
  }
}

</mosaic_0001>

<llo_original>
// kernel: temporal_critic_forward.1
$region0: #{temporal_critic_forward.1}
  #allocation0 [shape = 'u32[]', space=smem, size = 0x4, offset = 0x4, fixed_abs, tag = 'smem constant byte address 0x4 - core index']
  #allocation1 [shape = 'u32[72,128]{1,0:T(1,128)}', space=vmem, size = 0x9000, scoped, tag = 'internal scratch']
  #allocation2 [shape = 'f32[1,1]{1,0:T(1,128)S(1)}', space=vmem, size = 0x200, scoped, tag = 'scoped memory for temporal_critic_forward.1']
  %s0 = inlined_call_operand.vmem [shape: bf16[16,256], index: 0, kind: input, shape index: {}]
  %s1 = inlined_call_operand.vmem [shape: bf16[256,128], index: 1, kind: input, shape index: {}]
  %s2 = inlined_call_operand.vmem [shape: f32[1,128], index: 2, kind: input, shape index: {}]
  %s3 = inlined_call_operand.vmem [shape: bf16[128,128], index: 3, kind: input, shape index: {}]
  %s4 = inlined_call_operand.vmem [shape: f32[1,128], index: 4, kind: input, shape index: {}]
  %s5 = inlined_call_operand.vmem [shape: bf16[128,128], index: 5, kind: input, shape index: {}]
  %s6 = inlined_call_operand.vmem [shape: f32[1,128], index: 6, kind: input, shape index: {}]
  %s7 = inlined_call_operand.vmem [shape: bf16[128,128], index: 7, kind: input, shape index: {}]
  %s8 = inlined_call_operand.vmem [shape: f32[1,128], index: 8, kind: input, shape index: {}]
  %s9 = inlined_call_operand.vmem [shape: bf16[128,128], index: 9, kind: input, shape index: {}]
  %s10 = inlined_call_operand.vmem [shape: f32[1,128], index: 10, kind: input, shape index: {}]
  %s11 = inlined_call_operand.vmem [shape: bf16[128,128], index: 11, kind: input, shape index: {}]
  %s12 = inlined_call_operand.vmem [shape: f32[1,128], index: 12, kind: input, shape index: {}]
  %s13 = inlined_call_operand.vmem [shape: bf16[128,128], index: 13, kind: input, shape index: {}]
  %s14 = inlined_call_operand.vmem [shape: f32[1,128], index: 14, kind: input, shape index: {}]
  %s15 = inlined_call_operand.vmem [shape: bf16[128,128], index: 15, kind: input, shape index: {}]
  %s16 = inlined_call_operand.vmem [shape: f32[1,128], index: 16, kind: input, shape index: {}]
  %s17 = inlined_call_operand.vmem [shape: f32[1,128], index: 17, kind: input, shape index: {}]
  %s18 = inlined_call_operand.<no memory space> [shape: f32[1,1], index: 18, kind: input, shape index: {}]
  %s19 = inlined_call_operand.vmem [shape: f32[16,1], index: 19, kind: output, shape index: {}]
  %s20 = sld [smem:[#allocation0]]
  $region86: #{temporal_critic_forward.1} parent=0
    _
  %s22 = ssub.s32 1, %s20
  %s23 = scalar_select 0, %s22, %s20
  %v24 = vstv %s18
  %25 = vst [vmem:[#allocation2] sm:$0x1] %v24
  // Predicated region
  $region2: #{temporal_critic_forward.1} parent=0 // pred_check
    _
  $region3: #{temporal_critic_forward.1} parent=0 // pred_check_branch
    %27 = sbr.rel (0) target = $region5
  $region4: #{temporal_critic_forward.1} parent=0 // pred_region
    _
  $region5: #{temporal_critic_forward.1} parent=0 // pred_fallthru
    _
  // Predicated region
  $region6: #{temporal_critic_forward.1} parent=0 // pred_check
    _
  $region7: #{temporal_critic_forward.1} parent=0 // pred_check_branch
    %29 = sbr.rel (0) target = $region9
  $region8: #{temporal_critic_forward.1} parent=0 // pred_region
    _
  $region9: #{temporal_critic_forward.1} parent=0 // pred_fallthru
    _
  // Predicated region
  $region10: #{temporal_critic_forward.1} parent=0 // pred_check
    _
  $region11: #{temporal_critic_forward.1} parent=0 // pred_check_branch
    %31 = sbr.rel (0) target = $region13
  $region12: #{temporal_critic_forward.1} parent=0 // pred_region
    _
  $region13: #{temporal_critic_forward.1} parent=0 // pred_fallthru
    _
  // Predicated region
  $region14: #{temporal_critic_forward.1} parent=0 // pred_check
    _
  $region15: #{temporal_critic_forward.1} parent=0 // pred_check_branch
    %33 = sbr.rel (0) target = $region17
  $region16: #{temporal_critic_forward.1} parent=0 // pred_region
    _
  $region17: #{temporal_critic_forward.1} parent=0 // pred_fallthru
    _
  // Predicated region
  $region18: #{temporal_critic_forward.1} parent=0 // pred_check
    _
  $region19: #{temporal_critic_forward.1} parent=0 // pred_check_branch
    %35 = sbr.rel (0) target = $region21
  $region20: #{temporal_critic_forward.1} parent=0 // pred_region
    _
  $region21: #{temporal_critic_forward.1} parent=0 // pred_fallthru
    _
  // Predicated region
  $region22: #{temporal_critic_forward.1} parent=0 // pred_check
    _
  $region23: #{temporal_critic_forward.1} parent=0 // pred_check_branch
    %37 = sbr.rel (0) target = $region25
  $region24: #{temporal_critic_forward.1} parent=0 // pred_region
    _
  $region25: #{temporal_critic_forward.1} parent=0 // pred_fallthru
    _
  // Predicated region
  $region26: #{temporal_critic_forward.1} parent=0 // pred_check
    _
  $region27: #{temporal_critic_forward.1} parent=0 // pred_check_branch
    %39 = sbr.rel (0) target = $region29
  $region28: #{temporal_critic_forward.1} parent=0 // pred_region
    _
  $region29: #{temporal_critic_forward.1} parent=0 // pred_fallthru
    _
  // Predicated region
  $region30: #{temporal_critic_forward.1} parent=0 // pred_check
    _
  $region31: #{temporal_critic_forward.1} parent=0 // pred_check_branch
    %41 = sbr.rel (0) target = $region33
  $region32: #{temporal_critic_forward.1} parent=0 // pred_region
    _
  $region33: #{temporal_critic_forward.1} parent=0 // pred_fallthru
    _
  // Predicated region
  $region34: #{temporal_critic_forward.1} parent=0 // pred_check
    _
  $region35: #{temporal_critic_forward.1} parent=0 // pred_check_branch
    %43 = sbr.rel (0) target = $region37
  $region36: #{temporal_critic_forward.1} parent=0 // pred_region
    _
  $region37: #{temporal_critic_forward.1} parent=0 // pred_fallthru
    _
  // Predicated region
  $region38: #{temporal_critic_forward.1} parent=0 // pred_check
    _
  $region39: #{temporal_critic_forward.1} parent=0 // pred_check_branch
    %45 = sbr.rel (0) target = $region41
  $region40: #{temporal_critic_forward.1} parent=0 // pred_region
    _
  $region41: #{temporal_critic_forward.1} parent=0 // pred_fallthru
    _
  // Predicated region
  $region42: #{temporal_critic_forward.1} parent=0 // pred_check
    _
  $region43: #{temporal_critic_forward.1} parent=0 // pred_check_branch
    %47 = sbr.rel (0) target = $region45
  $region44: #{temporal_critic_forward.1} parent=0 // pred_region
    _
  $region45: #{temporal_critic_forward.1} parent=0 // pred_fallthru
    _
  // Predicated region
  $region46: #{temporal_critic_forward.1} parent=0 // pred_check
    _
  $region47: #{temporal_critic_forward.1} parent=0 // pred_check_branch
    %49 = sbr.rel (0) target = $region49
  $region48: #{temporal_critic_forward.1} parent=0 // pred_region
    _
  $region49: #{temporal_critic_forward.1} parent=0 // pred_fallthru
    _
  // Predicated region
  $region50: #{temporal_critic_forward.1} parent=0 // pred_check
    _
  $region51: #{temporal_critic_forward.1} parent=0 // pred_check_branch
    %51 = sbr.rel (0) target = $region53
  $region52: #{temporal_critic_forward.1} parent=0 // pred_region
    _
  $region53: #{temporal_critic_forward.1} parent=0 // pred_fallthru
    _
  // Predicated region
  $region54: #{temporal_critic_forward.1} parent=0 // pred_check
    _
  $region55: #{temporal_critic_forward.1} parent=0 // pred_check_branch
    %53 = sbr.rel (0) target = $region57
  $region56: #{temporal_critic_forward.1} parent=0 // pred_region
    _
  $region57: #{temporal_critic_forward.1} parent=0 // pred_fallthru
    _
  // Predicated region
  $region58: #{temporal_critic_forward.1} parent=0 // pred_check
    _
  $region59: #{temporal_critic_forward.1} parent=0 // pred_check_branch
    %55 = sbr.rel (0) target = $region61
  $region60: #{temporal_critic_forward.1} parent=0 // pred_region
    _
  $region61: #{temporal_critic_forward.1} parent=0 // pred_fallthru
    _
  // Predicated region
  $region62: #{temporal_critic_forward.1} parent=0 // pred_check
    _
  $region63: #{temporal_critic_forward.1} parent=0 // pred_check_branch
    %57 = sbr.rel (0) target = $region65
  $region64: #{temporal_critic_forward.1} parent=0 // pred_region
    _
  $region65: #{temporal_critic_forward.1} parent=0 // pred_fallthru
    _
  // Predicated region
  $region66: #{temporal_critic_forward.1} parent=0 // pred_check
    _
  $region67: #{temporal_critic_forward.1} parent=0 // pred_check_branch
    %59 = sbr.rel (0) target = $region69
  $region68: #{temporal_critic_forward.1} parent=0 // pred_region
    _
  $region69: #{temporal_critic_forward.1} parent=0 // pred_fallthru
    _
  // Predicated region
  $region70: #{temporal_critic_forward.1} parent=0 // pred_check
    _
  $region71: #{temporal_critic_forward.1} parent=0 // pred_check_branch
    %61 = sbr.rel (0) target = $region73
  $region72: #{temporal_critic_forward.1} parent=0 // pred_region
    _
  $region73: #{temporal_critic_forward.1} parent=0 // pred_fallthru
    _
  // Predicated region
  $region74: #{temporal_critic_forward.1} parent=0 // pred_check
    _
  $region75: #{temporal_critic_forward.1} parent=0 // pred_check_branch
    %63 = sbr.rel (0) target = $region77
  $region76: #{temporal_critic_forward.1} parent=0 // pred_region
    _
  $region77: #{temporal_critic_forward.1} parent=0 // pred_fallthru
    _
  %v64 = vld [vmem:[%s3] sm:$0xf]
  %v65 = vld [vmem:[%s3 + $0x4] sm:$0xf]
  %v66 = vld [vmem:[%s3 + $0x8] sm:$0xf]
  %v67 = vld [vmem:[%s3 + $0xc] sm:$0xf]
  %v68 = vld [vmem:[%s3 + $0x10] sm:$0xf]
  %v69 = vld [vmem:[%s3 + $0x14] sm:$0xf]
  %v70 = vld [vmem:[%s3 + $0x18] sm:$0xf]
  %v71 = vld [vmem:[%s3 + $0x1c] sm:$0xf]
  %v72 = vld [vmem:[%s3 + $0x20] sm:$0xf]
  %v73 = vld [vmem:[%s3 + $0x24] sm:$0xf]
  %v74 = vld [vmem:[%s3 + $0x28] sm:$0xf]
  %v75 = vld [vmem:[%s3 + $0x2c] sm:$0xf]
  %v76 = vld [vmem:[%s3 + $0x30] sm:$0xf]
  %v77 = vld [vmem:[%s3 + $0x34] sm:$0xf]
  %v78 = vld [vmem:[%s3 + $0x38] sm:$0xf]
  %v79 = vld [vmem:[%s3 + $0x3c] sm:$0xf]
  %v80 = vld [vmem:[%s4] sm:$0x1]
  %v81 = vld [vmem:[%s5] sm:$0xf]
  %v82 = vld [vmem:[%s5 + $0x4] sm:$0xf]
  %v83 = vld [vmem:[%s5 + $0x8] sm:$0xf]
  %v84 = vld [vmem:[%s5 + $0xc] sm:$0xf]
  %v85 = vld [vmem:[%s5 + $0x10] sm:$0xf]
  %v86 = vld [vmem:[%s5 + $0x14] sm:$0xf]
  %v87 = vld [vmem:[%s5 + $0x18] sm:$0xf]
  %v88 = vld [vmem:[%s5 + $0x1c] sm:$0xf]
  %v89 = vld [vmem:[%s5 + $0x20] sm:$0xf]
  %v90 = vld [vmem:[%s5 + $0x24] sm:$0xf]
  %v91 = vld [vmem:[%s5 + $0x28] sm:$0xf]
  %v92 = vld [vmem:[%s5 + $0x2c] sm:$0xf]
  %v93 = vld [vmem:[%s5 + $0x30] sm:$0xf]
  %v94 = vld [vmem:[%s5 + $0x34] sm:$0xf]
  %v95 = vld [vmem:[%s5 + $0x38] sm:$0xf]
  %v96 = vld [vmem:[%s5 + $0x3c] sm:$0xf]
  %v97 = vld [vmem:[%s6] sm:$0x1]
  %v98 = vld [vmem:[%s7] sm:$0xf]
  %v99 = vld [vmem:[%s7 + $0x4] sm:$0xf]
  %v100 = vld [vmem:[%s7 + $0x8] sm:$0xf]
  %v101 = vld [vmem:[%s7 + $0xc] sm:$0xf]
  %v102 = vld [vmem:[%s7 + $0x10] sm:$0xf]
  %v103 = vld [vmem:[%s7 + $0x14] sm:$0xf]
  %v104 = vld [vmem:[%s7 + $0x18] sm:$0xf]
  %v105 = vld [vmem:[%s7 + $0x1c] sm:$0xf]
  %v106 = vld [vmem:[%s7 + $0x20] sm:$0xf]
  %v107 = vld [vmem:[%s7 + $0x24] sm:$0xf]
  %v108 = vld [vmem:[%s7 + $0x28] sm:$0xf]
  %v109 = vld [vmem:[%s7 + $0x2c] sm:$0xf]
  %v110 = vld [vmem:[%s7 + $0x30] sm:$0xf]
  %v111 = vld [vmem:[%s7 + $0x34] sm:$0xf]
  %v112 = vld [vmem:[%s7 + $0x38] sm:$0xf]
  %v113 = vld [vmem:[%s7 + $0x3c] sm:$0xf]
  %v114 = vld [vmem:[%s8] sm:$0x1]
  %v115 = vld [vmem:[%s9] sm:$0xf]
  %v116 = vld [vmem:[%s9 + $0x4] sm:$0xf]
  %v117 = vld [vmem:[%s9 + $0x8] sm:$0xf]
  %v118 = vld [vmem:[%s9 + $0xc] sm:$0xf]
  %v119 = vld [vmem:[%s9 + $0x10] sm:$0xf]
  %v120 = vld [vmem:[%s9 + $0x14] sm:$0xf]
  %v121 = vld [vmem:[%s9 + $0x18] sm:$0xf]
  %v122 = vld [vmem:[%s9 + $0x1c] sm:$0xf]
  %v123 = vld [vmem:[%s9 + $0x20] sm:$0xf]
  %v124 = vld [vmem:[%s9 + $0x24] sm:$0xf]
  %v125 = vld [vmem:[%s9 + $0x28] sm:$0xf]
  %v126 = vld [vmem:[%s9 + $0x2c] sm:$0xf]
  %v127 = vld [vmem:[%s9 + $0x30] sm:$0xf]
  %v128 = vld [vmem:[%s9 + $0x34] sm:$0xf]
  %v129 = vld [vmem:[%s9 + $0x38] sm:$0xf]
  %v130 = vld [vmem:[%s9 + $0x3c] sm:$0xf]
  %v131 = vld [vmem:[%s10] sm:$0x1]
  %v132 = vld [vmem:[%s11] sm:$0xf]
  %v133 = vld [vmem:[%s11 + $0x4] sm:$0xf]
  %v134 = vld [vmem:[%s11 + $0x8] sm:$0xf]
  %v135 = vld [vmem:[%s11 + $0xc] sm:$0xf]
  %v136 = vld [vmem:[%s11 + $0x10] sm:$0xf]
  %v137 = vld [vmem:[%s11 + $0x14] sm:$0xf]
  %v138 = vld [vmem:[%s11 + $0x18] sm:$0xf]
  %v139 = vld [vmem:[%s11 + $0x1c] sm:$0xf]
  %v140 = vld [vmem:[%s11 + $0x20] sm:$0xf]
  %v141 = vld [vmem:[%s11 + $0x24] sm:$0xf]
  %v142 = vld [vmem:[%s11 + $0x28] sm:$0xf]
  %v143 = vld [vmem:[%s11 + $0x2c] sm:$0xf]
  %v144 = vld [vmem:[%s11 + $0x30] sm:$0xf]
  %v145 = vld [vmem:[%s11 + $0x34] sm:$0xf]
  %v146 = vld [vmem:[%s11 + $0x38] sm:$0xf]
  %v147 = vld [vmem:[%s11 + $0x3c] sm:$0xf]
  %v148 = vld [vmem:[%s12] sm:$0x1]
  %v149 = vld [vmem:[%s13] sm:$0xf]
  %v150 = vld [vmem:[%s13 + $0x4] sm:$0xf]
  %v151 = vld [vmem:[%s13 + $0x8] sm:$0xf]
  %v152 = vld [vmem:[%s13 + $0xc] sm:$0xf]
  %v153 = vld [vmem:[%s13 + $0x10] sm:$0xf]
  %v154 = vld [vmem:[%s13 + $0x14] sm:$0xf]
  %v155 = vld [vmem:[%s13 + $0x18] sm:$0xf]
  %v156 = vld [vmem:[%s13 + $0x1c] sm:$0xf]
  %v157 = vld [vmem:[%s13 + $0x20] sm:$0xf]
  %v158 = vld [vmem:[%s13 + $0x24] sm:$0xf]
  %v159 = vld [vmem:[%s13 + $0x28] sm:$0xf]
  %v160 = vld [vmem:[%s13 + $0x2c] sm:$0xf]
  %v161 = vld [vmem:[%s13 + $0x30] sm:$0xf]
  %v162 = vld [vmem:[%s13 + $0x34] sm:$0xf]
  %v163 = vld [vmem:[%s13 + $0x38] sm:$0xf]
  %v164 = vld [vmem:[%s13 + $0x3c] sm:$0xf]
  %v165 = vld [vmem:[%s14] sm:$0x1]
  %v166 = vld [vmem:[%s0] sm:$0xff]
  %v167 = vld [vmem:[%s0 + $0x8] sm:$0xff]
  %v168 = vld [vmem:[%s1] sm:$0xf]
  %v169 = vld [vmem:[%s1 + $0x4] sm:$0xf]
  %v170 = vld [vmem:[%s1 + $0x8] sm:$0xf]
  %v171 = vld [vmem:[%s1 + $0xc] sm:$0xf]
  %v172 = vld [vmem:[%s1 + $0x10] sm:$0xf]
  %v173 = vld [vmem:[%s1 + $0x14] sm:$0xf]
  %v174 = vld [vmem:[%s1 + $0x18] sm:$0xf]
  %v175 = vld [vmem:[%s1 + $0x1c] sm:$0xf]
  %v176 = vld [vmem:[%s1 + $0x20] sm:$0xf]
  %v177 = vld [vmem:[%s1 + $0x24] sm:$0xf]
  %v178 = vld [vmem:[%s1 + $0x28] sm:$0xf]
  %v179 = vld [vmem:[%s1 + $0x2c] sm:$0xf]
  %v180 = vld [vmem:[%s1 + $0x30] sm:$0xf]
  %v181 = vld [vmem:[%s1 + $0x34] sm:$0xf]
  %v182 = vld [vmem:[%s1 + $0x38] sm:$0xf]
  %v183 = vld [vmem:[%s1 + $0x3c] sm:$0xf]
  %v184 = vld [vmem:[%s1 + $0x40] sm:$0xf]
  %v185 = vld [vmem:[%s1 + $0x44] sm:$0xf]
  %v186 = vld [vmem:[%s1 + $0x48] sm:$0xf]
  %v187 = vld [vmem:[%s1 + $0x4c] sm:$0xf]
  %v188 = vld [vmem:[%s1 + $0x50] sm:$0xf]
  %v189 = vld [vmem:[%s1 + $0x54] sm:$0xf]
  %v190 = vld [vmem:[%s1 + $0x58] sm:$0xf]
  %v191 = vld [vmem:[%s1 + $0x5c] sm:$0xf]
  %v192 = vld [vmem:[%s1 + $0x60] sm:$0xf]
  %v193 = vld [vmem:[%s1 + $0x64] sm:$0xf]
  %v194 = vld [vmem:[%s1 + $0x68] sm:$0xf]
  %v195 = vld [vmem:[%s1 + $0x6c] sm:$0xf]
  %v196 = vld [vmem:[%s1 + $0x70] sm:$0xf]
  %v197 = vld [vmem:[%s1 + $0x74] sm:$0xf]
  %v198 = vld [vmem:[%s1 + $0x78] sm:$0xf]
  %v199 = vld [vmem:[%s1 + $0x7c] sm:$0xf]
  %v200 = vld [vmem:[%s2] sm:$0x1]
  %v201 = vld [vmem:[%s15] sm:$0xf]
  %v202 = vld [vmem:[%s15 + $0x4] sm:$0xf]
  %v203 = vld [vmem:[%s15 + $0x8] sm:$0xf]
  %v204 = vld [vmem:[%s15 + $0xc] sm:$0xf]
  %v205 = vld [vmem:[%s15 + $0x10] sm:$0xf]
  %v206 = vld [vmem:[%s15 + $0x14] sm:$0xf]
  %v207 = vld [vmem:[%s15 + $0x18] sm:$0xf]
  %v208 = vld [vmem:[%s15 + $0x1c] sm:$0xf]
  %v209 = vld [vmem:[%s15 + $0x20] sm:$0xf]
  %v210 = vld [vmem:[%s15 + $0x24] sm:$0xf]
  %v211 = vld [vmem:[%s15 + $0x28] sm:$0xf]
  %v212 = vld [vmem:[%s15 + $0x2c] sm:$0xf]
  %v213 = vld [vmem:[%s15 + $0x30] sm:$0xf]
  %v214 = vld [vmem:[%s15 + $0x34] sm:$0xf]
  %v215 = vld [vmem:[%s15 + $0x38] sm:$0xf]
  %v216 = vld [vmem:[%s15 + $0x3c] sm:$0xf]
  %v217 = vld [vmem:[%s16] sm:$0x1]
  %v218 = vld [vmem:[%s17] sm:$0x1]
  %v219 = vld [vmem:[#allocation2] sm:$0x1]
  %v221 = vperm.slane %v200, 0
  %v225 = vunpack.c.l.b16 %v166
  %v226 = vunpack.c.h.b16 %v166
  %v227 = vunpack.c.l.b16 %v167
  %v228 = vunpack.c.h.b16 %v167
  %v229 = vpack.c.b16 %v227, %v225
  %v230 = vpack.c.b16 %v228, %v226
  %v265 = vunpack.c.l.b16 %v168
  %v266 = vunpack.c.l.b16 %v169
  %v267 = vunpack.c.l.b16 %v170
  %v268 = vunpack.c.l.b16 %v171
  %v269 = vunpack.c.l.b16 %v172
  %v270 = vunpack.c.l.b16 %v173
  %v271 = vunpack.c.l.b16 %v174
  %v272 = vunpack.c.l.b16 %v175
  %v273 = vunpack.c.l.b16 %v176
  %v274 = vunpack.c.l.b16 %v177
  %v275 = vunpack.c.l.b16 %v178
  %v276 = vunpack.c.l.b16 %v179
  %v277 = vunpack.c.l.b16 %v180
  %v278 = vunpack.c.l.b16 %v181
  %v279 = vunpack.c.l.b16 %v182
  %v280 = vunpack.c.l.b16 %v183
  %v281 = vunpack.c.l.b16 %v184
  %v282 = vunpack.c.l.b16 %v185
  %v283 = vunpack.c.l.b16 %v186
  %v284 = vunpack.c.l.b16 %v187
  %v285 = vunpack.c.l.b16 %v188
  %v286 = vunpack.c.l.b16 %v189
  %v287 = vunpack.c.l.b16 %v190
  %v288 = vunpack.c.l.b16 %v191
  %v289 = vunpack.c.l.b16 %v192
  %v290 = vunpack.c.l.b16 %v193
  %v291 = vunpack.c.l.b16 %v194
  %v292 = vunpack.c.l.b16 %v195
  %v293 = vunpack.c.l.b16 %v196
  %v294 = vunpack.c.l.b16 %v197
  %v295 = vunpack.c.l.b16 %v198
  %v296 = vunpack.c.l.b16 %v199
  %v297 = vpack.c.b16 %v266, %v265
  %v298 = vpack.c.b16 %v268, %v267
  %v299 = vpack.c.b16 %v270, %v269
  %v300 = vpack.c.b16 %v272, %v271
  %v301 = vpack.c.b16 %v274, %v273
  %v302 = vpack.c.b16 %v276, %v275
  %v303 = vpack.c.b16 %v278, %v277
  %v304 = vpack.c.b16 %v280, %v279
  %v305 = vpack.c.b16 %v282, %v281
  %v306 = vpack.c.b16 %v284, %v283
  %v307 = vpack.c.b16 %v286, %v285
  %v308 = vpack.c.b16 %v288, %v287
  %v309 = vpack.c.b16 %v290, %v289
  %v310 = vpack.c.b16 %v292, %v291
  %v311 = vpack.c.b16 %v294, %v293
  %v312 = vpack.c.b16 %v296, %v295
  %329 = vmatpush.bf16.msra.mxu0 %v304
  %330 = vmatpush.bf16.msra.mxu0 %v303
  %331 = vmatpush.bf16.msra.mxu0 %v302
  %332 = vmatpush.bf16.msra.mxu0 %v301
  %333 = vmatpush.bf16.msra.mxu0 %v300
  %334 = vmatpush.bf16.msra.mxu0 %v299
  %335 = vmatpush.bf16.msra.mxu0 %v298
  %336 = vmatpush.bf16.msra.mxu0 %v297
  %337 = vmatmul.bf16.gmra.mxu0 %v229
  %v338 = vpop.f32.mrf.mxu0
  %v339 = vadd.f32 %v221, %v338
  %v340 = vpop.f32.mrf.mxu0
  %v341 = vadd.f32 %v221, %v340
  %342 = vdwg.mxu0
  %343 = vmatpush.bf16.msra.mxu0 %v312
  %344 = vmatpush.bf16.msra.mxu0 %v311
  %345 = vmatpush.bf16.msra.mxu0 %v310
  %346 = vmatpush.bf16.msra.mxu0 %v309
  %347 = vmatpush.bf16.msra.mxu0 %v308
  %348 = vmatpush.bf16.msra.mxu0 %v307
  %349 = vmatpush.bf16.msra.mxu0 %v306
  %350 = vmatpush.bf16.msra.mxu0 %v305
  %351 = vmatmul.bf16.gmra.mxu0 %v230
  %v352 = vpop.f32.mrf.mxu0
  %v353 = vadd.f32 %v339, %v352
  %v354 = vpop.f32.mrf.mxu0
  %v355 = vadd.f32 %v341, %v354
  %356 = vdwg.mxu0
  %v357 = vmul.f32 %v353, 0.01
  %v358 = vmul.f32 %v355, 0.01
  %v359 = vmax.f32 %v353, %v357
  %v360 = vmax.f32 %v355, %v358
  %v361 = vpack.c.bf16 %v360, %v359
  %v363 = vperm.slane %v80, 0
  %v381 = vunpack.c.l.b16 %v64
  %v382 = vunpack.c.l.b16 %v65
  %v383 = vunpack.c.l.b16 %v66
  %v384 = vunpack.c.l.b16 %v67
  %v385 = vunpack.c.l.b16 %v68
  %v386 = vunpack.c.l.b16 %v69
  %v387 = vunpack.c.l.b16 %v70
  %v388 = vunpack.c.l.b16 %v71
  %v389 = vunpack.c.l.b16 %v72
  %v390 = vunpack.c.l.b16 %v73
  %v391 = vunpack.c.l.b16 %v74
  %v392 = vunpack.c.l.b16 %v75
  %v393 = vunpack.c.l.b16 %v76
  %v394 = vunpack.c.l.b16 %v77
  %v395 = vunpack.c.l.b16 %v78
  %v396 = vunpack.c.l.b16 %v79
  %v397 = vpack.c.b16 %v382, %v381
  %v398 = vpack.c.b16 %v384, %v383
  %v399 = vpack.c.b16 %v386, %v385
  %v400 = vpack.c.b16 %v388, %v387
  %v401 = vpack.c.b16 %v390, %v389
  %v402 = vpack.c.b16 %v392, %v391
  %v403 = vpack.c.b16 %v394, %v393
  %v404 = vpack.c.b16 %v396, %v395
  %413 = vmatpush.bf16.msra.mxu0 %v404
  %414 = vmatpush.bf16.msra.mxu0 %v403
  %415 = vmatpush.bf16.msra.mxu0 %v402
  %416 = vmatpush.bf16.msra.mxu0 %v401
  %417 = vmatpush.bf16.msra.mxu0 %v400
  %418 = vmatpush.bf16.msra.mxu0 %v399
  %419 = vmatpush.bf16.msra.mxu0 %v398
  %420 = vmatpush.bf16.msra.mxu0 %v397
  %421 = vmatmul.bf16.gmra.mxu0 %v361
  %v422 = vpop.f32.mrf.mxu0
  %v423 = vadd.f32 %v363, %v422
  %v424 = vpop.f32.mrf.mxu0
  %v425 = vadd.f32 %v363, %v424
  %426 = vdwg.mxu0
  %v427 = vmul.f32 %v423, 0.01
  %v428 = vmul.f32 %v425, 0.01
  %v429 = vmax.f32 %v423, %v427
  %v430 = vmax.f32 %v425, %v428
  %v431 = vpack.c.bf16 %v430, %v429
  %v433 = vperm.slane %v97, 0
  %v451 = vunpack.c.l.b16 %v81
  %v452 = vunpack.c.l.b16 %v82
  %v453 = vunpack.c.l.b16 %v83
  %v454 = vunpack.c.l.b16 %v84
  %v455 = vunpack.c.l.b16 %v85
  %v456 = vunpack.c.l.b16 %v86
  %v457 = vunpack.c.l.b16 %v87
  %v458 = vunpack.c.l.b16 %v88
  %v459 = vunpack.c.l.b16 %v89
  %v460 = vunpack.c.l.b16 %v90
  %v461 = vunpack.c.l.b16 %v91
  %v462 = vunpack.c.l.b16 %v92
  %v463 = vunpack.c.l.b16 %v93
  %v464 = vunpack.c.l.b16 %v94
  %v465 = vunpack.c.l.b16 %v95
  %v466 = vunpack.c.l.b16 %v96
  %v467 = vpack.c.b16 %v452, %v451
  %v468 = vpack.c.b16 %v454, %v453
  %v469 = vpack.c.b16 %v456, %v455
  %v470 = vpack.c.b16 %v458, %v457
  %v471 = vpack.c.b16 %v460, %v459
  %v472 = vpack.c.b16 %v462, %v461
  %v473 = vpack.c.b16 %v464, %v463
  %v474 = vpack.c.b16 %v466, %v465
  %483 = vmatpush.bf16.msra.mxu0 %v474
  %484 = vmatpush.bf16.msra.mxu0 %v473
  %485 = vmatpush.bf16.msra.mxu0 %v472
  %486 = vmatpush.bf16.msra.mxu0 %v471
  %487 = vmatpush.bf16.msra.mxu0 %v470
  %488 = vmatpush.bf16.msra.mxu0 %v469
  %489 = vmatpush.bf16.msra.mxu0 %v468
  %490 = vmatpush.bf16.msra.mxu0 %v467
  %491 = vmatmul.bf16.gmra.mxu0 %v431
  %v492 = vpop.f32.mrf.mxu0
  %v493 = vadd.f32 %v433, %v492
  %v494 = vpop.f32.mrf.mxu0
  %v495 = vadd.f32 %v433, %v494
  %496 = vdwg.mxu0
  %v497 = vadd.f32 %v359, %v493
  %v498 = vadd.f32 %v360, %v495
  %v499 = vmul.f32 %v497, 0.01
  %v500 = vmul.f32 %v498, 0.01
  %v501 = vmax.f32 %v497, %v499
  %v502 = vmax.f32 %v498, %v500
  %v503 = vpack.c.bf16 %v502, %v501
  %v505 = vperm.slane %v114, 0
  %v523 = vunpack.c.l.b16 %v98
  %v524 = vunpack.c.l.b16 %v99
  %v525 = vunpack.c.l.b16 %v100
  %v526 = vunpack.c.l.b16 %v101
  %v527 = vunpack.c.l.b16 %v102
  %v528 = vunpack.c.l.b16 %v103
  %v529 = vunpack.c.l.b16 %v104
  %v530 = vunpack.c.l.b16 %v105
  %v531 = vunpack.c.l.b16 %v106
  %v532 = vunpack.c.l.b16 %v107
  %v533 = vunpack.c.l.b16 %v108
  %v534 = vunpack.c.l.b16 %v109
  %v535 = vunpack.c.l.b16 %v110
  %v536 = vunpack.c.l.b16 %v111
  %v537 = vunpack.c.l.b16 %v112
  %v538 = vunpack.c.l.b16 %v113
  %v539 = vpack.c.b16 %v524, %v523
  %v540 = vpack.c.b16 %v526, %v525
  %v541 = vpack.c.b16 %v528, %v527
  %v542 = vpack.c.b16 %v530, %v529
  %v543 = vpack.c.b16 %v532, %v531
  %v544 = vpack.c.b16 %v534, %v533
  %v545 = vpack.c.b16 %v536, %v535
  %v546 = vpack.c.b16 %v538, %v537
  %555 = vmatpush.bf16.msra.mxu0 %v546
  %556 = vmatpush.bf16.msra.mxu0 %v545
  %557 = vmatpush.bf16.msra.mxu0 %v544
  %558 = vmatpush.bf16.msra.mxu0 %v543
  %559 = vmatpush.bf16.msra.mxu0 %v542
  %560 = vmatpush.bf16.msra.mxu0 %v541
  %561 = vmatpush.bf16.msra.mxu0 %v540
  %562 = vmatpush.bf16.msra.mxu0 %v539
  %563 = vmatmul.bf16.gmra.mxu0 %v503
  %v564 = vpop.f32.mrf.mxu0
  %v565 = vadd.f32 %v505, %v564
  %v566 = vpop.f32.mrf.mxu0
  %v567 = vadd.f32 %v505, %v566
  %568 = vdwg.mxu0
  %v569 = vmul.f32 %v565, 0.01
  %v570 = vmul.f32 %v567, 0.01
  %v571 = vmax.f32 %v565, %v569
  %v572 = vmax.f32 %v567, %v570
  %v573 = vpack.c.bf16 %v572, %v571
  %v575 = vperm.slane %v131, 0
  %v593 = vunpack.c.l.b16 %v115
  %v594 = vunpack.c.l.b16 %v116
  %v595 = vunpack.c.l.b16 %v117
  %v596 = vunpack.c.l.b16 %v118
  %v597 = vunpack.c.l.b16 %v119
  %v598 = vunpack.c.l.b16 %v120
  %v599 = vunpack.c.l.b16 %v121
  %v600 = vunpack.c.l.b16 %v122
  %v601 = vunpack.c.l.b16 %v123
  %v602 = vunpack.c.l.b16 %v124
  %v603 = vunpack.c.l.b16 %v125
  %v604 = vunpack.c.l.b16 %v126
  %v605 = vunpack.c.l.b16 %v127
  %v606 = vunpack.c.l.b16 %v128
  %v607 = vunpack.c.l.b16 %v129
  %v608 = vunpack.c.l.b16 %v130
  %v609 = vpack.c.b16 %v594, %v593
  %v610 = vpack.c.b16 %v596, %v595
  %v611 = vpack.c.b16 %v598, %v597
  %v612 = vpack.c.b16 %v600, %v599
  %v613 = vpack.c.b16 %v602, %v601
  %v614 = vpack.c.b16 %v604, %v603
  %v615 = vpack.c.b16 %v606, %v605
  %v616 = vpack.c.b16 %v608, %v607
  %625 = vmatpush.bf16.msra.mxu0 %v616
  %626 = vmatpush.bf16.msra.mxu0 %v615
  %627 = vmatpush.bf16.msra.mxu0 %v614
  %628 = vmatpush.bf16.msra.mxu0 %v613
  %629 = vmatpush.bf16.msra.mxu0 %v612
  %630 = vmatpush.bf16.msra.mxu0 %v611
  %631 = vmatpush.bf16.msra.mxu0 %v610
  %632 = vmatpush.bf16.msra.mxu0 %v609
  %633 = vmatmul.bf16.gmra.mxu0 %v573
  %v634 = vpop.f32.mrf.mxu0
  %v635 = vadd.f32 %v575, %v634
  %v636 = vpop.f32.mrf.mxu0
  %v637 = vadd.f32 %v575, %v636
  %638 = vdwg.mxu0
  %v639 = vadd.f32 %v501, %v635
  %v640 = vadd.f32 %v502, %v637
  %v641 = vmul.f32 %v639, 0.01
  %v642 = vmul.f32 %v640, 0.01
  %v643 = vmax.f32 %v639, %v641
  %v644 = vmax.f32 %v640, %v642
  %v645 = vpack.c.bf16 %v644, %v643
  %v647 = vperm.slane %v148, 0
  %v665 = vunpack.c.l.b16 %v132
  %v666 = vunpack.c.l.b16 %v133
  %v667 = vunpack.c.l.b16 %v134
  %v668 = vunpack.c.l.b16 %v135
  %v669 = vunpack.c.l.b16 %v136
  %v670 = vunpack.c.l.b16 %v137
  %v671 = vunpack.c.l.b16 %v138
  %v672 = vunpack.c.l.b16 %v139
  %v673 = vunpack.c.l.b16 %v140
  %v674 = vunpack.c.l.b16 %v141
  %v675 = vunpack.c.l.b16 %v142
  %v676 = vunpack.c.l.b16 %v143
  %v677 = vunpack.c.l.b16 %v144
  %v678 = vunpack.c.l.b16 %v145
  %v679 = vunpack.c.l.b16 %v146
  %v680 = vunpack.c.l.b16 %v147
  %v681 = vpack.c.b16 %v666, %v665
  %v682 = vpack.c.b16 %v668, %v667
  %v683 = vpack.c.b16 %v670, %v669
  %v684 = vpack.c.b16 %v672, %v671
  %v685 = vpack.c.b16 %v674, %v673
  %v686 = vpack.c.b16 %v676, %v675
  %v687 = vpack.c.b16 %v678, %v677
  %v688 = vpack.c.b16 %v680, %v679
  %697 = vmatpush.bf16.msra.mxu0 %v688
  %698 = vmatpush.bf16.msra.mxu0 %v687
  %699 = vmatpush.bf16.msra.mxu0 %v686
  %700 = vmatpush.bf16.msra.mxu0 %v685
  %701 = vmatpush.bf16.msra.mxu0 %v684
  %702 = vmatpush.bf16.msra.mxu0 %v683
  %703 = vmatpush.bf16.msra.mxu0 %v682
  %704 = vmatpush.bf16.msra.mxu0 %v681
  %705 = vmatmul.bf16.gmra.mxu0 %v645
  %v706 = vpop.f32.mrf.mxu0
  %v707 = vadd.f32 %v647, %v706
  %v708 = vpop.f32.mrf.mxu0
  %v709 = vadd.f32 %v647, %v708
  %710 = vdwg.mxu0
  %v711 = vmul.f32 %v707, 0.01
  %v712 = vmul.f32 %v709, 0.01
  %v713 = vmax.f32 %v707, %v711
  %v714 = vmax.f32 %v709, %v712
  %v715 = vpack.c.bf16 %v714, %v713
  %v717 = vperm.slane %v165, 0
  %v735 = vunpack.c.l.b16 %v149
  %v736 = vunpack.c.l.b16 %v150
  %v737 = vunpack.c.l.b16 %v151
  %v738 = vunpack.c.l.b16 %v152
  %v739 = vunpack.c.l.b16 %v153
  %v740 = vunpack.c.l.b16 %v154
  %v741 = vunpack.c.l.b16 %v155
  %v742 = vunpack.c.l.b16 %v156
  %v743 = vunpack.c.l.b16 %v157
  %v744 = vunpack.c.l.b16 %v158
  %v745 = vunpack.c.l.b16 %v159
  %v746 = vunpack.c.l.b16 %v160
  %v747 = vunpack.c.l.b16 %v161
  %v748 = vunpack.c.l.b16 %v162
  %v749 = vunpack.c.l.b16 %v163
  %v750 = vunpack.c.l.b16 %v164
  %v751 = vpack.c.b16 %v736, %v735
  %v752 = vpack.c.b16 %v738, %v737
  %v753 = vpack.c.b16 %v740, %v739
  %v754 = vpack.c.b16 %v742, %v741
  %v755 = vpack.c.b16 %v744, %v743
  %v756 = vpack.c.b16 %v746, %v745
  %v757 = vpack.c.b16 %v748, %v747
  %v758 = vpack.c.b16 %v750, %v749
  %767 = vmatpush.bf16.msra.mxu0 %v758
  %768 = vmatpush.bf16.msra.mxu0 %v757
  %769 = vmatpush.bf16.msra.mxu0 %v756
  %770 = vmatpush.bf16.msra.mxu0 %v755
  %771 = vmatpush.bf16.msra.mxu0 %v754
  %772 = vmatpush.bf16.msra.mxu0 %v753
  %773 = vmatpush.bf16.msra.mxu0 %v752
  %774 = vmatpush.bf16.msra.mxu0 %v751
  %775 = vmatmul.bf16.gmra.mxu0 %v715
  %v776 = vpop.f32.mrf.mxu0
  %v777 = vadd.f32 %v717, %v776
  %v778 = vpop.f32.mrf.mxu0
  %v779 = vadd.f32 %v717, %v778
  %780 = vdwg.mxu0
  %v781 = vadd.f32 %v643, %v777
  %v782 = vadd.f32 %v644, %v779
  %v783 = vmul.f32 %v781, 0.01
  %v784 = vmul.f32 %v782, 0.01
  %v785 = vmax.f32 %v781, %v783
  %v786 = vmax.f32 %v782, %v784
  %v787 = vpack.c.bf16 %v786, %v785
  %v789 = vperm.slane %v217, 0
  %v807 = vunpack.c.l.b16 %v201
  %v808 = vunpack.c.l.b16 %v202
  %v809 = vunpack.c.l.b16 %v203
  %v810 = vunpack.c.l.b16 %v204
  %v811 = vunpack.c.l.b16 %v205
  %v812 = vunpack.c.l.b16 %v206
  %v813 = vunpack.c.l.b16 %v207
  %v814 = vunpack.c.l.b16 %v208
  %v815 = vunpack.c.l.b16 %v209
  %v816 = vunpack.c.l.b16 %v210
  %v817 = vunpack.c.l.b16 %v211
  %v818 = vunpack.c.l.b16 %v212
  %v819 = vunpack.c.l.b16 %v213
  %v820 = vunpack.c.l.b16 %v214
  %v821 = vunpack.c.l.b16 %v215
  %v822 = vunpack.c.l.b16 %v216
  %v823 = vpack.c.b16 %v808, %v807
  %v824 = vpack.c.b16 %v810, %v809
  %v825 = vpack.c.b16 %v812, %v811
  %v826 = vpack.c.b16 %v814, %v813
  %v827 = vpack.c.b16 %v816, %v815
  %v828 = vpack.c.b16 %v818, %v817
  %v829 = vpack.c.b16 %v820, %v819
  %v830 = vpack.c.b16 %v822, %v821
  %839 = vmatpush.bf16.msra.mxu0 %v830
  %840 = vmatpush.bf16.msra.mxu0 %v829
  %841 = vmatpush.bf16.msra.mxu0 %v828
  %842 = vmatpush.bf16.msra.mxu0 %v827
  %843 = vmatpush.bf16.msra.mxu0 %v826
  %844 = vmatpush.bf16.msra.mxu0 %v825
  %845 = vmatpush.bf16.msra.mxu0 %v824
  %846 = vmatpush.bf16.msra.mxu0 %v823
  %847 = vmatmul.bf16.gmra.mxu0 %v787
  %v848 = vpop.f32.mrf.mxu0
  %v849 = vadd.f32 %v789, %v848
  %v850 = vpop.f32.mrf.mxu0
  %v851 = vadd.f32 %v789, %v850
  %852 = vdwg.mxu0
  %v853 = vmul.f32 %v849, 0.01
  %v854 = vmul.f32 %v851, 0.01
  %v855 = vmax.f32 %v849, %v853
  %v856 = vmax.f32 %v851, %v854
  %v858 = vperm.slane %v218, 0
  %v860 = vmul.f32 %v855, %v858
  %v861 = vmul.f32 %v856, %v858
  %862 = vadd.xlane.f32.xlu0 %v860
  %v863 = vpop.xlane.xlu0 %862
  %864 = vadd.xlane.f32.xlu0 %v861
  %v865 = vpop.xlane.xlu0 %864
  %v867 = vperm.slane %v219, 0
  %v869 = vadd.f32 %v863, %v867
  %v870 = vadd.f32 %v865, %v867
  %vm871 = vcmask 7168
  %872 = vst.msk [vmem:[%s19] sm:$0xff] %vm871, %v869
  %873 = vst.msk [vmem:[%s19 + $0x8] sm:$0xff] %vm871, %v870
  // Predicated region
  $region78: #{temporal_critic_forward.1} parent=0 // pred_check
    _
  $region79: #{temporal_critic_forward.1} parent=0 // pred_check_branch
    %875 = sbr.rel (0) target = $region81
  $region80: #{temporal_critic_forward.1} parent=0 // pred_region
    _
  $region81: #{temporal_critic_forward.1} parent=0 // pred_fallthru
    _
  // Predicated region
  $region82: #{temporal_critic_forward.1} parent=0 // pred_check
    _
  $region83: #{temporal_critic_forward.1} parent=0 // pred_check_branch
    %877 = sbr.rel (0) target = $region85
  $region84: #{temporal_critic_forward.1} parent=0 // pred_region
    _
  $region85: #{temporal_critic_forward.1} parent=0 // pred_fallthru
    _

// kernel: temporal_critic_forward.1
$region0: #{temporal_critic_forward.1}
  #allocation0 [shape = 'u32[]', space=smem, size = 0x4, offset = 0x4, fixed_abs, tag = 'smem constant byte address 0x4 - core index']
  #allocation1 [shape = 'u32[72,128]{1,0:T(1,128)}', space=vmem, size = 0x9000, scoped, tag = 'internal scratch']
  #allocation2 [shape = 'f32[1,1]{1,0:T(1,128)S(1)}', space=vmem, size = 0x200, scoped, tag = 'scoped memory for temporal_critic_forward.1']
  %s0 = inlined_call_operand.vmem [shape: bf16[16,256], index: 0, kind: input, shape index: {}]
  %s1 = inlined_call_operand.vmem [shape: bf16[256,128], index: 1, kind: input, shape index: {}]
  %s2 = inlined_call_operand.vmem [shape: f32[1,128], index: 2, kind: input, shape index: {}]
  %s3 = inlined_call_operand.vmem [shape: bf16[128,128], index: 3, kind: input, shape index: {}]
  %s4 = inlined_call_operand.vmem [shape: f32[1,128], index: 4, kind: input, shape index: {}]
  %s5 = inlined_call_operand.vmem [shape: bf16[128,128], index: 5, kind: input, shape index: {}]
  %s6 = inlined_call_operand.vmem [shape: f32[1,128], index: 6, kind: input, shape index: {}]
  %s7 = inlined_call_operand.vmem [shape: bf16[128,128], index: 7, kind: input, shape index: {}]
  %s8 = inlined_call_operand.vmem [shape: f32[1,128], index: 8, kind: input, shape index: {}]
  %s9 = inlined_call_operand.vmem [shape: bf16[128,128], index: 9, kind: input, shape index: {}]
  %s10 = inlined_call_operand.vmem [shape: f32[1,128], index: 10, kind: input, shape index: {}]
  %s11 = inlined_call_operand.vmem [shape: bf16[128,128], index: 11, kind: input, shape index: {}]
  %s12 = inlined_call_operand.vmem [shape: f32[1,128], index: 12, kind: input, shape index: {}]
  %s13 = inlined_call_operand.vmem [shape: bf16[128,128], index: 13, kind: input, shape index: {}]
  %s14 = inlined_call_operand.vmem [shape: f32[1,128], index: 14, kind: input, shape index: {}]
  %s15 = inlined_call_operand.vmem [shape: bf16[128,128], index: 15, kind: input, shape index: {}]
  %s16 = inlined_call_operand.vmem [shape: f32[1,128], index: 16, kind: input, shape index: {}]
  %s17 = inlined_call_operand.vmem [shape: f32[1,128], index: 17, kind: input, shape index: {}]
  %s18 = inlined_call_operand.<no memory space> [shape: f32[1,1], index: 18, kind: input, shape index: {}]
  %s19 = inlined_call_operand.vmem [shape: f32[16,1], index: 19, kind: output, shape index: {}]
  %s20 = sld [smem:[#allocation0]]
  $region86: #{temporal_critic_forward.1} parent=0
    _
  %s22 = ssub.s32 1, %s20
  %s23 = scalar_select 0, %s22, %s20
  %v24 = vstv %s18
  %25 = vst [vmem:[#allocation2] sm:$0x1] %v24
  // Predicated region
  $region2: #{temporal_critic_forward.1} parent=0 // pred_check
    _
  $region3: #{temporal_critic_forward.1} parent=0 // pred_check_branch
    %27 = sbr.rel (0) target = $region5
  $region4: #{temporal_critic_forward.1} parent=0 // pred_region
    _
  $region5: #{temporal_critic_forward.1} parent=0 // pred_fallthru
    _
  // Predicated region
  $region6: #{temporal_critic_forward.1} parent=0 // pred_check
    _
  $region7: #{temporal_critic_forward.1} parent=0 // pred_check_branch
    %29 = sbr.rel (0) target = $region9
  $region8: #{temporal_critic_forward.1} parent=0 // pred_region
    _
  $region9: #{temporal_critic_forward.1} parent=0 // pred_fallthru
    _
  // Predicated region
  $region10: #{temporal_critic_forward.1} parent=0 // pred_check
    _
  $region11: #{temporal_critic_forward.1} parent=0 // pred_check_branch
    %31 = sbr.rel (0) target = $region13
  $region12: #{temporal_critic_forward.1} parent=0 // pred_region
    _
  $region13: #{temporal_critic_forward.1} parent=0 // pred_fallthru
    _
  // Predicated region
  $region14: #{temporal_critic_forward.1} parent=0 // pred_check
    _
  $region15: #{temporal_critic_forward.1} parent=0 // pred_check_branch
    %33 = sbr.rel (0) target = $region17
  $region16: #{temporal_critic_forward.1} parent=0 // pred_region
    _
  $region17: #{temporal_critic_forward.1} parent=0 // pred_fallthru
    _
  // Predicated region
  $region18: #{temporal_critic_forward.1} parent=0 // pred_check
    _
  $region19: #{temporal_critic_forward.1} parent=0 // pred_check_branch
    %35 = sbr.rel (0) target = $region21
  $region20: #{temporal_critic_forward.1} parent=0 // pred_region
    _
  $region21: #{temporal_critic_forward.1} parent=0 // pred_fallthru
    _
  // Predicated region
  $region22: #{temporal_critic_forward.1} parent=0 // pred_check
    _
  $region23: #{temporal_critic_forward.1} parent=0 // pred_check_branch
    %37 = sbr.rel (0) target = $region25
  $region24: #{temporal_critic_forward.1} parent=0 // pred_region
    _
  $region25: #{temporal_critic_forward.1} parent=0 // pred_fallthru
    _
  // Predicated region
  $region26: #{temporal_critic_forward.1} parent=0 // pred_check
    _
  $region27: #{temporal_critic_forward.1} parent=0 // pred_check_branch
    %39 = sbr.rel (0) target = $region29
  $region28: #{temporal_critic_forward.1} parent=0 // pred_region
    _
  $region29: #{temporal_critic_forward.1} parent=0 // pred_fallthru
    _
  // Predicated region
  $region30: #{temporal_critic_forward.1} parent=0 // pred_check
    _
  $region31: #{temporal_critic_forward.1} parent=0 // pred_check_branch
    %41 = sbr.rel (0) target = $region33
  $region32: #{temporal_critic_forward.1} parent=0 // pred_region
    _
  $region33: #{temporal_critic_forward.1} parent=0 // pred_fallthru
    _
  // Predicated region
  $region34: #{temporal_critic_forward.1} parent=0 // pred_check
    _
  $region35: #{temporal_critic_forward.1} parent=0 // pred_check_branch
    %43 = sbr.rel (0) target = $region37
  $region36: #{temporal_critic_forward.1} parent=0 // pred_region
    _
  $region37: #{temporal_critic_forward.1} parent=0 // pred_fallthru
    _
  // Predicated region
  $region38: #{temporal_critic_forward.1} parent=0 // pred_check
    _
  $region39: #{temporal_critic_forward.1} parent=0 // pred_check_branch
    %45 = sbr.rel (0) target = $region41
  $region40: #{temporal_critic_forward.1} parent=0 // pred_region
    _
  $region41: #{temporal_critic_forward.1} parent=0 // pred_fallthru
    _
  // Predicated region
  $region42: #{temporal_critic_forward.1} parent=0 // pred_check
    _
  $region43: #{temporal_critic_forward.1} parent=0 // pred_check_branch
    %47 = sbr.rel (0) target = $region45
  $region44: #{temporal_critic_forward.1} parent=0 // pred_region
    _
  $region45: #{temporal_critic_forward.1} parent=0 // pred_fallthru
    _
  // Predicated region
  $region46: #{temporal_critic_forward.1} parent=0 // pred_check
    _
  $region47: #{temporal_critic_forward.1} parent=0 // pred_check_branch
    %49 = sbr.rel (0) target = $region49
  $region48: #{temporal_critic_forward.1} parent=0 // pred_region
    _
  $region49: #{temporal_critic_forward.1} parent=0 // pred_fallthru
    _
  // Predicated region
  $region50: #{temporal_critic_forward.1} parent=0 // pred_check
    _
  $region51: #{temporal_critic_forward.1} parent=0 // pred_check_branch
    %51 = sbr.rel (0) target = $region53
  $region52: #{temporal_critic_forward.1} parent=0 // pred_region
    _
  $region53: #{temporal_critic_forward.1} parent=0 // pred_fallthru
    _
  // Predicated region
  $region54: #{temporal_critic_forward.1} parent=0 // pred_check
    _
  $region55: #{temporal_critic_forward.1} parent=0 // pred_check_branch
    %53 = sbr.rel (0) target = $region57
  $region56: #{temporal_critic_forward.1} parent=0 // pred_region
    _
  $region57: #{temporal_critic_forward.1} parent=0 // pred_fallthru
    _
  // Predicated region
  $region58: #{temporal_critic_forward.1} parent=0 // pred_check
    _
  $region59: #{temporal_critic_forward.1} parent=0 // pred_check_branch
    %55 = sbr.rel (0) target = $region61
  $region60: #{temporal_critic_forward.1} parent=0 // pred_region
    _
  $region61: #{temporal_critic_forward.1} parent=0 // pred_fallthru
    _
  // Predicated region
  $region62: #{temporal_critic_forward.1} parent=0 // pred_check
    _
  $region63: #{temporal_critic_forward.1} parent=0 // pred_check_branch
    %57 = sbr.rel (0) target = $region65
  $region64: #{temporal_critic_forward.1} parent=0 // pred_region
    _
  $region65: #{temporal_critic_forward.1} parent=0 // pred_fallthru
    _
  // Predicated region
  $region66: #{temporal_critic_forward.1} parent=0 // pred_check
    _
  $region67: #{temporal_critic_forward.1} parent=0 // pred_check_branch
    %59 = sbr.rel (0) target = $region69
  $region68: #{temporal_critic_forward.1} parent=0 // pred_region
    _
  $region69: #{temporal_critic_forward.1} parent=0 // pred_fallthru
    _
  // Predicated region
  $region70: #{temporal_critic_forward.1} parent=0 // pred_check
    _
  $region71: #{temporal_critic_forward.1} parent=0 // pred_check_branch
    %61 = sbr.rel (0) target = $region73
  $region72: #{temporal_critic_forward.1} parent=0 // pred_region
    _
  $region73: #{temporal_critic_forward.1} parent=0 // pred_fallthru
    _
  // Predicated region
  $region74: #{temporal_critic_forward.1} parent=0 // pred_check
    _
  $region75: #{temporal_critic_forward.1} parent=0 // pred_check_branch
    %63 = sbr.rel (0) target = $region77
  $region76: #{temporal_critic_forward.1} parent=0 // pred_region
    _
  $region77: #{temporal_critic_forward.1} parent=0 // pred_fallthru
    _
  %v64 = vld [vmem:[%s3] sm:$0xf]
  %v65 = vld [vmem:[%s3 + $0x4] sm:$0xf]
  %v66 = vld [vmem:[%s3 + $0x8] sm:$0xf]
  %v67 = vld [vmem:[%s3 + $0xc] sm:$0xf]
  %v68 = vld [vmem:[%s3 + $0x10] sm:$0xf]
  %v69 = vld [vmem:[%s3 + $0x14] sm:$0xf]
  %v70 = vld [vmem:[%s3 + $0x18] sm:$0xf]
  %v71 = vld [vmem:[%s3 + $0x1c] sm:$0xf]
  %v72 = vld [vmem:[%s3 + $0x20] sm:$0xf]
  %v73 = vld [vmem:[%s3 + $0x24] sm:$0xf]
  %v74 = vld [vmem:[%s3 + $0x28] sm:$0xf]
  %v75 = vld [vmem:[%s3 + $0x2c] sm:$0xf]
  %v76 = vld [vmem:[%s3 + $0x30] sm:$0xf]
  %v77 = vld [vmem:[%s3 + $0x34] sm:$0xf]
  %v78 = vld [vmem:[%s3 + $0x38] sm:$0xf]
  %v79 = vld [vmem:[%s3 + $0x3c] sm:$0xf]
  %v80 = vld [vmem:[%s4] sm:$0x1]
  %v81 = vld [vmem:[%s5] sm:$0xf]
  %v82 = vld [vmem:[%s5 + $0x4] sm:$0xf]
  %v83 = vld [vmem:[%s5 + $0x8] sm:$0xf]
  %v84 = vld [vmem:[%s5 + $0xc] sm:$0xf]
  %v85 = vld [vmem:[%s5 + $0x10] sm:$0xf]
  %v86 = vld [vmem:[%s5 + $0x14] sm:$0xf]
  %v87 = vld [vmem:[%s5 + $0x18] sm:$0xf]
  %v88 = vld [vmem:[%s5 + $0x1c] sm:$0xf]
  %v89 = vld [vmem:[%s5 + $0x20] sm:$0xf]
  %v90 = vld [vmem:[%s5 + $0x24] sm:$0xf]
  %v91 = vld [vmem:[%s5 + $0x28] sm:$0xf]
  %v92 = vld [vmem:[%s5 + $0x2c] sm:$0xf]
  %v93 = vld [vmem:[%s5 + $0x30] sm:$0xf]
  %v94 = vld [vmem:[%s5 + $0x34] sm:$0xf]
  %v95 = vld [vmem:[%s5 + $0x38] sm:$0xf]
  %v96 = vld [vmem:[%s5 + $0x3c] sm:$0xf]
  %v97 = vld [vmem:[%s6] sm:$0x1]
  %v98 = vld [vmem:[%s7] sm:$0xf]
  %v99 = vld [vmem:[%s7 + $0x4] sm:$0xf]
  %v100 = vld [vmem:[%s7 + $0x8] sm:$0xf]
  %v101 = vld [vmem:[%s7 + $0xc] sm:$0xf]
  %v102 = vld [vmem:[%s7 + $0x10] sm:$0xf]
  %v103 = vld [vmem:[%s7 + $0x14] sm:$0xf]
  %v104 = vld [vmem:[%s7 + $0x18] sm:$0xf]
  %v105 = vld [vmem:[%s7 + $0x1c] sm:$0xf]
  %v106 = vld [vmem:[%s7 + $0x20] sm:$0xf]
  %v107 = vld [vmem:[%s7 + $0x24] sm:$0xf]
  %v108 = vld [vmem:[%s7 + $0x28] sm:$0xf]
  %v109 = vld [vmem:[%s7 + $0x2c] sm:$0xf]
  %v110 = vld [vmem:[%s7 + $0x30] sm:$0xf]
  %v111 = vld [vmem:[%s7 + $0x34] sm:$0xf]
  %v112 = vld [vmem:[%s7 + $0x38] sm:$0xf]
  %v113 = vld [vmem:[%s7 + $0x3c] sm:$0xf]
  %v114 = vld [vmem:[%s8] sm:$0x1]
  %v115 = vld [vmem:[%s9] sm:$0xf]
  %v116 = vld [vmem:[%s9 + $0x4] sm:$0xf]
  %v117 = vld [vmem:[%s9 + $0x8] sm:$0xf]
  %v118 = vld [vmem:[%s9 + $0xc] sm:$0xf]
  %v119 = vld [vmem:[%s9 + $0x10] sm:$0xf]
  %v120 = vld [vmem:[%s9 + $0x14] sm:$0xf]
  %v121 = vld [vmem:[%s9 + $0x18] sm:$0xf]
  %v122 = vld [vmem:[%s9 + $0x1c] sm:$0xf]
  %v123 = vld [vmem:[%s9 + $0x20] sm:$0xf]
  %v124 = vld [vmem:[%s9 + $0x24] sm:$0xf]
  %v125 = vld [vmem:[%s9 + $0x28] sm:$0xf]
  %v126 = vld [vmem:[%s9 + $0x2c] sm:$0xf]
  %v127 = vld [vmem:[%s9 + $0x30] sm:$0xf]
  %v128 = vld [vmem:[%s9 + $0x34] sm:$0xf]
  %v129 = vld [vmem:[%s9 + $0x38] sm:$0xf]
  %v130 = vld [vmem:[%s9 + $0x3c] sm:$0xf]
  %v131 = vld [vmem:[%s10] sm:$0x1]
  %v132 = vld [vmem:[%s11] sm:$0xf]
  %v133 = vld [vmem:[%s11 + $0x4] sm:$0xf]
  %v134 = vld [vmem:[%s11 + $0x8] sm:$0xf]
  %v135 = vld [vmem:[%s11 + $0xc] sm:$0xf]
  %v136 = vld [vmem:[%s11 + $0x10] sm:$0xf]
  %v137 = vld [vmem:[%s11 + $0x14] sm:$0xf]
  %v138 = vld [vmem:[%s11 + $0x18] sm:$0xf]
  %v139 = vld [vmem:[%s11 + $0x1c] sm:$0xf]
  %v140 = vld [vmem:[%s11 + $0x20] sm:$0xf]
  %v141 = vld [vmem:[%s11 + $0x24] sm:$0xf]
  %v142 = vld [vmem:[%s11 + $0x28] sm:$0xf]
  %v143 = vld [vmem:[%s11 + $0x2c] sm:$0xf]
  %v144 = vld [vmem:[%s11 + $0x30] sm:$0xf]
  %v145 = vld [vmem:[%s11 + $0x34] sm:$0xf]
  %v146 = vld [vmem:[%s11 + $0x38] sm:$0xf]
  %v147 = vld [vmem:[%s11 + $0x3c] sm:$0xf]
  %v148 = vld [vmem:[%s12] sm:$0x1]
  %v149 = vld [vmem:[%s13] sm:$0xf]
  %v150 = vld [vmem:[%s13 + $0x4] sm:$0xf]
  %v151 = vld [vmem:[%s13 + $0x8] sm:$0xf]
  %v152 = vld [vmem:[%s13 + $0xc] sm:$0xf]
  %v153 = vld [vmem:[%s13 + $0x10] sm:$0xf]
  %v154 = vld [vmem:[%s13 + $0x14] sm:$0xf]
  %v155 = vld [vmem:[%s13 + $0x18] sm:$0xf]
  %v156 = vld [vmem:[%s13 + $0x1c] sm:$0xf]
  %v157 = vld [vmem:[%s13 + $0x20] sm:$0xf]
  %v158 = vld [vmem:[%s13 + $0x24] sm:$0xf]
  %v159 = vld [vmem:[%s13 + $0x28] sm:$0xf]
  %v160 = vld [vmem:[%s13 + $0x2c] sm:$0xf]
  %v161 = vld [vmem:[%s13 + $0x30] sm:$0xf]
  %v162 = vld [vmem:[%s13 + $0x34] sm:$0xf]
  %v163 = vld [vmem:[%s13 + $0x38] sm:$0xf]
  %v164 = vld [vmem:[%s13 + $0x3c] sm:$0xf]
  %v165 = vld [vmem:[%s14] sm:$0x1]
  %v166 = vld [vmem:[%s0] sm:$0xff]
  %v167 = vld [vmem:[%s0 + $0x8] sm:$0xff]
  %v168 = vld [vmem:[%s1] sm:$0xf]
  %v169 = vld [vmem:[%s1 + $0x4] sm:$0xf]
  %v170 = vld [vmem:[%s1 + $0x8] sm:$0xf]
  %v171 = vld [vmem:[%s1 + $0xc] sm:$0xf]
  %v172 = vld [vmem:[%s1 + $0x10] sm:$0xf]
  %v173 = vld [vmem:[%s1 + $0x14] sm:$0xf]
  %v174 = vld [vmem:[%s1 + $0x18] sm:$0xf]
  %v175 = vld [vmem:[%s1 + $0x1c] sm:$0xf]
  %v176 = vld [vmem:[%s1 + $0x20] sm:$0xf]
  %v177 = vld [vmem:[%s1 + $0x24] sm:$0xf]
  %v178 = vld [vmem:[%s1 + $0x28] sm:$0xf]
  %v179 = vld [vmem:[%s1 + $0x2c] sm:$0xf]
  %v180 = vld [vmem:[%s1 + $0x30] sm:$0xf]
  %v181 = vld [vmem:[%s1 + $0x34] sm:$0xf]
  %v182 = vld [vmem:[%s1 + $0x38] sm:$0xf]
  %v183 = vld [vmem:[%s1 + $0x3c] sm:$0xf]
  %v184 = vld [vmem:[%s1 + $0x40] sm:$0xf]
  %v185 = vld [vmem:[%s1 + $0x44] sm:$0xf]
  %v186 = vld [vmem:[%s1 + $0x48] sm:$0xf]
  %v187 = vld [vmem:[%s1 + $0x4c] sm:$0xf]
  %v188 = vld [vmem:[%s1 + $0x50] sm:$0xf]
  %v189 = vld [vmem:[%s1 + $0x54] sm:$0xf]
  %v190 = vld [vmem:[%s1 + $0x58] sm:$0xf]
  %v191 = vld [vmem:[%s1 + $0x5c] sm:$0xf]
  %v192 = vld [vmem:[%s1 + $0x60] sm:$0xf]
  %v193 = vld [vmem:[%s1 + $0x64] sm:$0xf]
  %v194 = vld [vmem:[%s1 + $0x68] sm:$0xf]
  %v195 = vld [vmem:[%s1 + $0x6c] sm:$0xf]
  %v196 = vld [vmem:[%s1 + $0x70] sm:$0xf]
  %v197 = vld [vmem:[%s1 + $0x74] sm:$0xf]
  %v198 = vld [vmem:[%s1 + $0x78] sm:$0xf]
  %v199 = vld [vmem:[%s1 + $0x7c] sm:$0xf]
  %v200 = vld [vmem:[%s2] sm:$0x1]
  %v201 = vld [vmem:[%s15] sm:$0xf]
  %v202 = vld [vmem:[%s15 + $0x4] sm:$0xf]
  %v203 = vld [vmem:[%s15 + $0x8] sm:$0xf]
  %v204 = vld [vmem:[%s15 + $0xc] sm:$0xf]
  %v205 = vld [vmem:[%s15 + $0x10] sm:$0xf]
  %v206 = vld [vmem:[%s15 + $0x14] sm:$0xf]
  %v207 = vld [vmem:[%s15 + $0x18] sm:$0xf]
  %v208 = vld [vmem:[%s15 + $0x1c] sm:$0xf]
  %v209 = vld [vmem:[%s15 + $0x20] sm:$0xf]
  %v210 = vld [vmem:[%s15 + $0x24] sm:$0xf]
  %v211 = vld [vmem:[%s15 + $0x28] sm:$0xf]
  %v212 = vld [vmem:[%s15 + $0x2c] sm:$0xf]
  %v213 = vld [vmem:[%s15 + $0x30] sm:$0xf]
  %v214 = vld [vmem:[%s15 + $0x34] sm:$0xf]
  %v215 = vld [vmem:[%s15 + $0x38] sm:$0xf]
  %v216 = vld [vmem:[%s15 + $0x3c] sm:$0xf]
  %v217 = vld [vmem:[%s16] sm:$0x1]
  %v218 = vld [vmem:[%s17] sm:$0x1]
  %v219 = vld [vmem:[#allocation2] sm:$0x1]
  %v221 = vperm.slane %v200, 0
  %v225 = vunpack.c.l.b16 %v166
  %v226 = vunpack.c.h.b16 %v166
  %v227 = vunpack.c.l.b16 %v167
  %v228 = vunpack.c.h.b16 %v167
  %v229 = vpack.c.b16 %v227, %v225
  %v230 = vpack.c.b16 %v228, %v226
  %v265 = vunpack.c.l.b16 %v168
  %v266 = vunpack.c.l.b16 %v169
  %v267 = vunpack.c.l.b16 %v170
  %v268 = vunpack.c.l.b16 %v171
  %v269 = vunpack.c.l.b16 %v172
  %v270 = vunpack.c.l.b16 %v173
  %v271 = vunpack.c.l.b16 %v174
  %v272 = vunpack.c.l.b16 %v175
  %v273 = vunpack.c.l.b16 %v176
  %v274 = vunpack.c.l.b16 %v177
  %v275 = vunpack.c.l.b16 %v178
  %v276 = vunpack.c.l.b16 %v179
  %v277 = vunpack.c.l.b16 %v180
  %v278 = vunpack.c.l.b16 %v181
  %v279 = vunpack.c.l.b16 %v182
  %v280 = vunpack.c.l.b16 %v183
  %v281 = vunpack.c.l.b16 %v184
  %v282 = vunpack.c.l.b16 %v185
  %v283 = vunpack.c.l.b16 %v186
  %v284 = vunpack.c.l.b16 %v187
  %v285 = vunpack.c.l.b16 %v188
  %v286 = vunpack.c.l.b16 %v189
  %v287 = vunpack.c.l.b16 %v190
  %v288 = vunpack.c.l.b16 %v191
  %v289 = vunpack.c.l.b16 %v192
  %v290 = vunpack.c.l.b16 %v193
  %v291 = vunpack.c.l.b16 %v194
  %v292 = vunpack.c.l.b16 %v195
  %v293 = vunpack.c.l.b16 %v196
  %v294 = vunpack.c.l.b16 %v197
  %v295 = vunpack.c.l.b16 %v198
  %v296 = vunpack.c.l.b16 %v199
  %v297 = vpack.c.b16 %v266, %v265
  %v298 = vpack.c.b16 %v268, %v267
  %v299 = vpack.c.b16 %v270, %v269
  %v300 = vpack.c.b16 %v272, %v271
  %v301 = vpack.c.b16 %v274, %v273
  %v302 = vpack.c.b16 %v276, %v275
  %v303 = vpack.c.b16 %v278, %v277
  %v304 = vpack.c.b16 %v280, %v279
  %v305 = vpack.c.b16 %v282, %v281
  %v306 = vpack.c.b16 %v284, %v283
  %v307 = vpack.c.b16 %v286, %v285
  %v308 = vpack.c.b16 %v288, %v287
  %v309 = vpack.c.b16 %v290, %v289
  %v310 = vpack.c.b16 %v292, %v291
  %v311 = vpack.c.b16 %v294, %v293
  %v312 = vpack.c.b16 %v296, %v295
  %329 = vmatpush.bf16.msra.mxu0 %v304
  %330 = vmatpush.bf16.msra.mxu0 %v303
  %331 = vmatpush.bf16.msra.mxu0 %v302
  %332 = vmatpush.bf16.msra.mxu0 %v301
  %333 = vmatpush.bf16.msra.mxu0 %v300
  %334 = vmatpush.bf16.msra.mxu0 %v299
  %335 = vmatpush.bf16.msra.mxu0 %v298
  %336 = vmatpush.bf16.msra.mxu0 %v297
  %337 = vmatmul.bf16.gmra.mxu0 %v229
  %v338 = vpop.f32.mrf.mxu0
  %v339 = vadd.f32 %v221, %v338
  %v340 = vpop.f32.mrf.mxu0
  %v341 = vadd.f32 %v221, %v340
  %342 = vdwg.mxu0
  %343 = vmatpush.bf16.msra.mxu0 %v312
  %344 = vmatpush.bf16.msra.mxu0 %v311
  %345 = vmatpush.bf16.msra.mxu0 %v310
  %346 = vmatpush.bf16.msra.mxu0 %v309
  %347 = vmatpush.bf16.msra.mxu0 %v308
  %348 = vmatpush.bf16.msra.mxu0 %v307
  %349 = vmatpush.bf16.msra.mxu0 %v306
  %350 = vmatpush.bf16.msra.mxu0 %v305
  %351 = vmatmul.bf16.gmra.mxu0 %v230
  %v352 = vpop.f32.mrf.mxu0
  %v353 = vadd.f32 %v339, %v352
  %v354 = vpop.f32.mrf.mxu0
  %v355 = vadd.f32 %v341, %v354
  %356 = vdwg.mxu0
  %v357 = vmul.f32 %v353, 0.01
  %v358 = vmul.f32 %v355, 0.01
  %v359 = vmax.f32 %v353, %v357
  %v360 = vmax.f32 %v355, %v358
  %v361 = vpack.c.bf16 %v360, %v359
  %v363 = vperm.slane %v80, 0
  %v381 = vunpack.c.l.b16 %v64
  %v382 = vunpack.c.l.b16 %v65
  %v383 = vunpack.c.l.b16 %v66
  %v384 = vunpack.c.l.b16 %v67
  %v385 = vunpack.c.l.b16 %v68
  %v386 = vunpack.c.l.b16 %v69
  %v387 = vunpack.c.l.b16 %v70
  %v388 = vunpack.c.l.b16 %v71
  %v389 = vunpack.c.l.b16 %v72
  %v390 = vunpack.c.l.b16 %v73
  %v391 = vunpack.c.l.b16 %v74
  %v392 = vunpack.c.l.b16 %v75
  %v393 = vunpack.c.l.b16 %v76
  %v394 = vunpack.c.l.b16 %v77
  %v395 = vunpack.c.l.b16 %v78
  %v396 = vunpack.c.l.b16 %v79
  %v397 = vpack.c.b16 %v382, %v381
  %v398 = vpack.c.b16 %v384, %v383
  %v399 = vpack.c.b16 %v386, %v385
  %v400 = vpack.c.b16 %v388, %v387
  %v401 = vpack.c.b16 %v390, %v389
  %v402 = vpack.c.b16 %v392, %v391
  %v403 = vpack.c.b16 %v394, %v393
  %v404 = vpack.c.b16 %v396, %v395
  %413 = vmatpush.bf16.msra.mxu0 %v404
  %414 = vmatpush.bf16.msra.mxu0 %v403
  %415 = vmatpush.bf16.msra.mxu0 %v402
  %416 = vmatpush.bf16.msra.mxu0 %v401
  %417 = vmatpush.bf16.msra.mxu0 %v400
  %418 = vmatpush.bf16.msra.mxu0 %v399
  %419 = vmatpush.bf16.msra.mxu0 %v398
  %420 = vmatpush.bf16.msra.mxu0 %v397
  %421 = vmatmul.bf16.gmra.mxu0 %v361
  %v422 = vpop.f32.mrf.mxu0
  %v423 = vadd.f32 %v363, %v422
  %v424 = vpop.f32.mrf.mxu0
  %v425 = vadd.f32 %v363, %v424
  %426 = vdwg.mxu0
  %v427 = vmul.f32 %v423, 0.01
  %v428 = vmul.f32 %v425, 0.01
  %v429 = vmax.f32 %v423, %v427
  %v430 = vmax.f32 %v425, %v428
  %v431 = vpack.c.bf16 %v430, %v429
  %v433 = vperm.slane %v97, 0
  %v451 = vunpack.c.l.b16 %v81
  %v452 = vunpack.c.l.b16 %v82
  %v453 = vunpack.c.l.b16 %v83
  %v454 = vunpack.c.l.b16 %v84
  %v455 = vunpack.c.l.b16 %v85
  %v456 = vunpack.c.l.b16 %v86
  %v457 = vunpack.c.l.b16 %v87
  %v458 = vunpack.c.l.b16 %v88
  %v459 = vunpack.c.l.b16 %v89
  %v460 = vunpack.c.l.b16 %v90
  %v461 = vunpack.c.l.b16 %v91
  %v462 = vunpack.c.l.b16 %v92
  %v463 = vunpack.c.l.b16 %v93
  %v464 = vunpack.c.l.b16 %v94
  %v465 = vunpack.c.l.b16 %v95
  %v466 = vunpack.c.l.b16 %v96
  %v467 = vpack.c.b16 %v452, %v451
  %v468 = vpack.c.b16 %v454, %v453
  %v469 = vpack.c.b16 %v456, %v455
  %v470 = vpack.c.b16 %v458, %v457
  %v471 = vpack.c.b16 %v460, %v459
  %v472 = vpack.c.b16 %v462, %v461
  %v473 = vpack.c.b16 %v464, %v463
  %v474 = vpack.c.b16 %v466, %v465
  %483 = vmatpush.bf16.msra.mxu0 %v474
  %484 = vmatpush.bf16.msra.mxu0 %v473
  %485 = vmatpush.bf16.msra.mxu0 %v472
  %486 = vmatpush.bf16.msra.mxu0 %v471
  %487 = vmatpush.bf16.msra.mxu0 %v470
  %488 = vmatpush.bf16.msra.mxu0 %v469
  %489 = vmatpush.bf16.msra.mxu0 %v468
  %490 = vmatpush.bf16.msra.mxu0 %v467
  %491 = vmatmul.bf16.gmra.mxu0 %v431
  %v492 = vpop.f32.mrf.mxu0
  %v493 = vadd.f32 %v433, %v492
  %v494 = vpop.f32.mrf.mxu0
  %v495 = vadd.f32 %v433, %v494
  %496 = vdwg.mxu0
  %v497 = vadd.f32 %v359, %v493
  %v498 = vadd.f32 %v360, %v495
  %v499 = vmul.f32 %v497, 0.01
  %v500 = vmul.f32 %v498, 0.01
  %v501 = vmax.f32 %v497, %v499
  %v502 = vmax.f32 %v498, %v500
  %v503 = vpack.c.bf16 %v502, %v501
  %v505 = vperm.slane %v114, 0
  %v523 = vunpack.c.l.b16 %v98
  %v524 = vunpack.c.l.b16 %v99
  %v525 = vunpack.c.l.b16 %v100
  %v526 = vunpack.c.l.b16 %v101
  %v527 = vunpack.c.l.b16 %v102
  %v528 = vunpack.c.l.b16 %v103
  %v529 = vunpack.c.l.b16 %v104
  %v530 = vunpack.c.l.b16 %v105
  %v531 = vunpack.c.l.b16 %v106
  %v532 = vunpack.c.l.b16 %v107
  %v533 = vunpack.c.l.b16 %v108
  %v534 = vunpack.c.l.b16 %v109
  %v535 = vunpack.c.l.b16 %v110
  %v536 = vunpack.c.l.b16 %v111
  %v537 = vunpack.c.l.b16 %v112
  %v538 = vunpack.c.l.b16 %v113
  %v539 = vpack.c.b16 %v524, %v523
  %v540 = vpack.c.b16 %v526, %v525
  %v541 = vpack.c.b16 %v528, %v527
  %v542 = vpack.c.b16 %v530, %v529
  %v543 = vpack.c.b16 %v532, %v531
  %v544 = vpack.c.b16 %v534, %v533
  %v545 = vpack.c.b16 %v536, %v535
  %v546 = vpack.c.b16 %v538, %v537
  %555 = vmatpush.bf16.msra.mxu0 %v546
  %556 = vmatpush.bf16.msra.mxu0 %v545
  %557 = vmatpush.bf16.msra.mxu0 %v544
  %558 = vmatpush.bf16.msra.mxu0 %v543
  %559 = vmatpush.bf16.msra.mxu0 %v542
  %560 = vmatpush.bf16.msra.mxu0 %v541
  %561 = vmatpush.bf16.msra.mxu0 %v540
  %562 = vmatpush.bf16.msra.mxu0 %v539
  %563 = vmatmul.bf16.gmra.mxu0 %v503
  %v564 = vpop.f32.mrf.mxu0
  %v565 = vadd.f32 %v505, %v564
  %v566 = vpop.f32.mrf.mxu0
  %v567 = vadd.f32 %v505, %v566
  %568 = vdwg.mxu0
  %v569 = vmul.f32 %v565, 0.01
  %v570 = vmul.f32 %v567, 0.01
  %v571 = vmax.f32 %v565, %v569
  %v572 = vmax.f32 %v567, %v570
  %v573 = vpack.c.bf16 %v572, %v571
  %v575 = vperm.slane %v131, 0
  %v593 = vunpack.c.l.b16 %v115
  %v594 = vunpack.c.l.b16 %v116
  %v595 = vunpack.c.l.b16 %v117
  %v596 = vunpack.c.l.b16 %v118
  %v597 = vunpack.c.l.b16 %v119
  %v598 = vunpack.c.l.b16 %v120
  %v599 = vunpack.c.l.b16 %v121
  %v600 = vunpack.c.l.b16 %v122
  %v601 = vunpack.c.l.b16 %v123
  %v602 = vunpack.c.l.b16 %v124
  %v603 = vunpack.c.l.b16 %v125
  %v604 = vunpack.c.l.b16 %v126
  %v605 = vunpack.c.l.b16 %v127
  %v606 = vunpack.c.l.b16 %v128
  %v607 = vunpack.c.l.b16 %v129
  %v608 = vunpack.c.l.b16 %v130
  %v609 = vpack.c.b16 %v594, %v593
  %v610 = vpack.c.b16 %v596, %v595
  %v611 = vpack.c.b16 %v598, %v597
  %v612 = vpack.c.b16 %v600, %v599
  %v613 = vpack.c.b16 %v602, %v601
  %v614 = vpack.c.b16 %v604, %v603
  %v615 = vpack.c.b16 %v606, %v605
  %v616 = vpack.c.b16 %v608, %v607
  %625 = vmatpush.bf16.msra.mxu0 %v616
  %626 = vmatpush.bf16.msra.mxu0 %v615
  %627 = vmatpush.bf16.msra.mxu0 %v614
  %628 = vmatpush.bf16.msra.mxu0 %v613
  %629 = vmatpush.bf16.msra.mxu0 %v612
  %630 = vmatpush.bf16.msra.mxu0 %v611
  %631 = vmatpush.bf16.msra.mxu0 %v610
  %632 = vmatpush.bf16.msra.mxu0 %v609
  %633 = vmatmul.bf16.gmra.mxu0 %v573
  %v634 = vpop.f32.mrf.mxu0
  %v635 = vadd.f32 %v575, %v634
  %v636 = vpop.f32.mrf.mxu0
  %v637 = vadd.f32 %v575, %v636
  %638 = vdwg.mxu0
  %v639 = vadd.f32 %v501, %v635
  %v640 = vadd.f32 %v502, %v637
  %v641 = vmul.f32 %v639, 0.01
  %v642 = vmul.f32 %v640, 0.01
  %v643 = vmax.f32 %v639, %v641
  %v644 = vmax.f32 %v640, %v642
  %v645 = vpack.c.bf16 %v644, %v643
  %v647 = vperm.slane %v148, 0
  %v665 = vunpack.c.l.b16 %v132
  %v666 = vunpack.c.l.b16 %v133
  %v667 = vunpack.c.l.b16 %v134
  %v668 = vunpack.c.l.b16 %v135
  %v669 = vunpack.c.l.b16 %v136
  %v670 = vunpack.c.l.b16 %v137
  %v671 = vunpack.c.l.b16 %v138
  %v672 = vunpack.c.l.b16 %v139
  %v673 = vunpack.c.l.b16 %v140
  %v674 = vunpack.c.l.b16 %v141
  %v675 = vunpack.c.l.b16 %v142
  %v676 = vunpack.c.l.b16 %v143
  %v677 = vunpack.c.l.b16 %v144
  %v678 = vunpack.c.l.b16 %v145
  %v679 = vunpack.c.l.b16 %v146
  %v680 = vunpack.c.l.b16 %v147
  %v681 = vpack.c.b16 %v666, %v665
  %v682 = vpack.c.b16 %v668, %v667
  %v683 = vpack.c.b16 %v670, %v669
  %v684 = vpack.c.b16 %v672, %v671
  %v685 = vpack.c.b16 %v674, %v673
  %v686 = vpack.c.b16 %v676, %v675
  %v687 = vpack.c.b16 %v678, %v677
  %v688 = vpack.c.b16 %v680, %v679
  %697 = vmatpush.bf16.msra.mxu0 %v688
  %698 = vmatpush.bf16.msra.mxu0 %v687
  %699 = vmatpush.bf16.msra.mxu0 %v686
  %700 = vmatpush.bf16.msra.mxu0 %v685
  %701 = vmatpush.bf16.msra.mxu0 %v684
  %702 = vmatpush.bf16.msra.mxu0 %v683
  %703 = vmatpush.bf16.msra.mxu0 %v682
  %704 = vmatpush.bf16.msra.mxu0 %v681
  %705 = vmatmul.bf16.gmra.mxu0 %v645
  %v706 = vpop.f32.mrf.mxu0
  %v707 = vadd.f32 %v647, %v706
  %v708 = vpop.f32.mrf.mxu0
  %v709 = vadd.f32 %v647, %v708
  %710 = vdwg.mxu0
  %v711 = vmul.f32 %v707, 0.01
  %v712 = vmul.f32 %v709, 0.01
  %v713 = vmax.f32 %v707, %v711
  %v714 = vmax.f32 %v709, %v712
  %v715 = vpack.c.bf16 %v714, %v713
  %v717 = vperm.slane %v165, 0
  %v735 = vunpack.c.l.b16 %v149
  %v736 = vunpack.c.l.b16 %v150
  %v737 = vunpack.c.l.b16 %v151
  %v738 = vunpack.c.l.b16 %v152
  %v739 = vunpack.c.l.b16 %v153
  %v740 = vunpack.c.l.b16 %v154
  %v741 = vunpack.c.l.b16 %v155
  %v742 = vunpack.c.l.b16 %v156
  %v743 = vunpack.c.l.b16 %v157
  %v744 = vunpack.c.l.b16 %v158
  %v745 = vunpack.c.l.b16 %v159
  %v746 = vunpack.c.l.b16 %v160
  %v747 = vunpack.c.l.b16 %v161
  %v748 = vunpack.c.l.b16 %v162
  %v749 = vunpack.c.l.b16 %v163
  %v750 = vunpack.c.l.b16 %v164
  %v751 = vpack.c.b16 %v736, %v735
  %v752 = vpack.c.b16 %v738, %v737
  %v753 = vpack.c.b16 %v740, %v739
  %v754 = vpack.c.b16 %v742, %v741
  %v755 = vpack.c.b16 %v744, %v743
  %v756 = vpack.c.b16 %v746, %v745
  %v757 = vpack.c.b16 %v748, %v747
  %v758 = vpack.c.b16 %v750, %v749
  %767 = vmatpush.bf16.msra.mxu0 %v758
  %768 = vmatpush.bf16.msra.mxu0 %v757
  %769 = vmatpush.bf16.msra.mxu0 %v756
  %770 = vmatpush.bf16.msra.mxu0 %v755
  %771 = vmatpush.bf16.msra.mxu0 %v754
  %772 = vmatpush.bf16.msra.mxu0 %v753
  %773 = vmatpush.bf16.msra.mxu0 %v752
  %774 = vmatpush.bf16.msra.mxu0 %v751
  %775 = vmatmul.bf16.gmra.mxu0 %v715
  %v776 = vpop.f32.mrf.mxu0
  %v777 = vadd.f32 %v717, %v776
  %v778 = vpop.f32.mrf.mxu0
  %v779 = vadd.f32 %v717, %v778
  %780 = vdwg.mxu0
  %v781 = vadd.f32 %v643, %v777
  %v782 = vadd.f32 %v644, %v779
  %v783 = vmul.f32 %v781, 0.01
  %v784 = vmul.f32 %v782, 0.01
  %v785 = vmax.f32 %v781, %v783
  %v786 = vmax.f32 %v782, %v784
  %v787 = vpack.c.bf16 %v786, %v785
  %v789 = vperm.slane %v217, 0
  %v807 = vunpack.c.l.b16 %v201
  %v808 = vunpack.c.l.b16 %v202
  %v809 = vunpack.c.l.b16 %v203
  %v810 = vunpack.c.l.b16 %v204
  %v811 = vunpack.c.l.b16 %v205
  %v812 = vunpack.c.l.b16 %v206
  %v813 = vunpack.c.l.b16 %v207
  %v814 = vunpack.c.l.b16 %v208
  %v815 = vunpack.c.l.b16 %v209
  %v816 = vunpack.c.l.b16 %v210
  %v817 = vunpack.c.l.b16 %v211
  %v818 = vunpack.c.l.b16 %v212
  %v819 = vunpack.c.l.b16 %v213
  %v820 = vunpack.c.l.b16 %v214
  %v821 = vunpack.c.l.b16 %v215
  %v822 = vunpack.c.l.b16 %v216
  %v823 = vpack.c.b16 %v808, %v807
  %v824 = vpack.c.b16 %v810, %v809
  %v825 = vpack.c.b16 %v812, %v811
  %v826 = vpack.c.b16 %v814, %v813
  %v827 = vpack.c.b16 %v816, %v815
  %v828 = vpack.c.b16 %v818, %v817
  %v829 = vpack.c.b16 %v820, %v819
  %v830 = vpack.c.b16 %v822, %v821
  %839 = vmatpush.bf16.msra.mxu0 %v830
  %840 = vmatpush.bf16.msra.mxu0 %v829
  %841 = vmatpush.bf16.msra.mxu0 %v828
  %842 = vmatpush.bf16.msra.mxu0 %v827
  %843 = vmatpush.bf16.msra.mxu0 %v826
  %844 = vmatpush.bf16.msra.mxu0 %v825
  %845 = vmatpush.bf16.msra.mxu0 %v824
  %846 = vmatpush.bf16.msra.mxu0 %v823
  %847 = vmatmul.bf16.gmra.mxu0 %v787
  %v848 = vpop.f32.mrf.mxu0
  %v849 = vadd.f32 %v789, %v848
  %v850 = vpop.f32.mrf.mxu0
  %v851 = vadd.f32 %v789, %v850
  %852 = vdwg.mxu0
  %v853 = vmul.f32 %v849, 0.01
  %v854 = vmul.f32 %v851, 0.01
  %v855 = vmax.f32 %v849, %v853
  %v856 = vmax.f32 %v851, %v854
  %v858 = vperm.slane %v218, 0
  %v860 = vmul.f32 %v855, %v858
  %v861 = vmul.f32 %v856, %v858
  %862 = vadd.xlane.f32.xlu0 %v860
  %v863 = vpop.xlane.xlu0 %862
  %864 = vadd.xlane.f32.xlu0 %v861
  %v865 = vpop.xlane.xlu0 %864
  %v867 = vperm.slane %v219, 0
  %v869 = vadd.f32 %v863, %v867
  %v870 = vadd.f32 %v865, %v867
  %vm871 = vcmask 7168
  %872 = vst.msk [vmem:[%s19] sm:$0xff] %vm871, %v869
  %873 = vst.msk [vmem:[%s19 + $0x8] sm:$0xff] %vm871, %v870
  // Predicated region
  $region78: #{temporal_critic_forward.1} parent=0 // pred_check
    _
  $region79: #{temporal_critic_forward.1} parent=0 // pred_check_branch
    %875 = sbr.rel (0) target = $region81
  $region80: #{temporal_critic_forward.1} parent=0 // pred_region
    _
  $region81: #{temporal_critic_forward.1} parent=0 // pred_fallthru
    _
  // Predicated region
  $region82: #{temporal_critic_forward.1} parent=0 // pred_check
    _
  $region83: #{temporal_critic_forward.1} parent=0 // pred_check_branch
    %877 = sbr.rel (0) target = $region85
  $region84: #{temporal_critic_forward.1} parent=0 // pred_region
    _
  $region85: #{temporal_critic_forward.1} parent=0 // pred_fallthru
    _

</llo_original>
